<compile_context>
chip_gen: v6e
topology: v6e:2x2x1
jax: 0.10.0
libtpu: 0.0.40
codegen_flags: <defaults>
</compile_context>

<pallas_src>
import math
from functools import partial

import jax
import jax.numpy as jnp
from jax import lax
from jax.experimental import pallas as pl
from jax.experimental.pallas import tpu as pltpu


DEFAULT_MASK_VALUE = -0.7 * float(jnp.finfo(jnp.float32).max)


def _pick_block(dim, preferred):
    """Largest tile <= preferred that is a multiple of 8 and divides dim."""
    preferred = max(8, min(int(preferred), dim))
    if dim % preferred == 0:
        return preferred
    b = (preferred // 8) * 8
    while b >= 8:
        if dim % b == 0:
            return b
        b -= 8
    return dim   # fall back to the full (possibly non-multiple-of-8) extent


# --------------------------------------------------------------------------
# Flash path: KV-tiled online softmax (default, output_attention=False)
# --------------------------------------------------------------------------
def _flash_attention_kernel(q_ref, k_ref, v_ref, o_ref, m_sc, l_sc, acc_sc, *,
                            scale, mask_flag, block_q, block_k, matmul_dtype):
    """One (batch, query-tile, kv-tile) grid step.

    q_ref : (1, H, BQ, E)   k_ref : (1, H, BK, E)   v_ref : (1, H, BK, D)
    o_ref : (1, BQ, H*D)    scratch: m/l (H,BQ,1), acc (H,BQ,D)  (f32)
    """
    H, _, D = acc_sc.shape
    ki = pl.program_id(2)
    q_start = pl.program_id(1) * block_q
    k_start = ki * block_k

    @pl.when(ki == 0)
    def _init():
        m_sc[...] = jnp.full_like(m_sc, DEFAULT_MASK_VALUE)
        l_sc[...] = jnp.zeros_like(l_sc)
        acc_sc[...] = jnp.zeros_like(acc_sc)

    def _compute():
        # Fold the softmax scale into Q (tiny tensor) instead of the scores.
        q = q_ref[0] * scale                       # (H, BQ, E) f32
        k = k_ref[0]
        v = v_ref[0]
        if matmul_dtype is not None:
            q = q.astype(matmul_dtype)
            k = k.astype(matmul_dtype)
            v = v.astype(matmul_dtype)

        # All heads in one batched MXU contraction; f32 accumulation.
        s = jnp.einsum("hqe,hke->hqk", q, k,
                       preferred_element_type=jnp.float32)     # (H, BQ, BK)

        if mask_flag:
            row = lax.broadcasted_iota(jnp.int32, (block_q, block_k), 0) + q_start
            col = lax.broadcasted_iota(jnp.int32, (block_q, block_k), 1) + k_start
            s = jnp.where((col <= row)[None, :, :], s, DEFAULT_MASK_VALUE)

        # Online softmax statistics (f32; required on v5e anyway).
        m_prev = m_sc[...]
        m_new = jnp.maximum(m_prev, jnp.max(s, axis=-1, keepdims=True))
        alpha = jnp.exp(m_prev - m_new)                         # (H, BQ, 1)
        p = jnp.exp(s - m_new)                                  # (H, BQ, BK)
        l_sc[...] = alpha * l_sc[...] + jnp.sum(p, axis=-1, keepdims=True)

        pv = p.astype(matmul_dtype) if matmul_dtype is not None else p
        acc_sc[...] = alpha * acc_sc[...] + jnp.einsum(
            "hqk,hkd->hqd", pv, v, preferred_element_type=jnp.float32)
        m_sc[...] = m_new

    if mask_flag:
        # Skip KV tiles that lie entirely above the causal diagonal.
        @pl.when(k_start <= q_start + (block_q - 1))
        def _():
            _compute()
    else:
        _compute()

    @pl.when(ki == pl.num_programs(2) - 1)
    def _finalize():
        inv = pl.reciprocal(l_sc[...], approx=False)            # (H, BQ, 1)
        o = acc_sc[...] * inv                                   # (H, BQ, D)
        # Lane-dense store: fill the (BQ, H*D) output block head by head.
        for h in range(H):
            o_ref[0, :, h * D:(h + 1) * D] = o[h].astype(o_ref.dtype)


# --------------------------------------------------------------------------
# Full-S path (output_attention=True): normalized A needs the global denom.
# --------------------------------------------------------------------------
def _full_attention_kernel(q_ref, k_ref, v_ref, o_ref, attn_ref, *,
                           scale, mask_flag, block_q, matmul_dtype):
    """One (batch, query-tile) grid step with full keys/values resident.

    q_ref : (1, H, BQ, E)  k_ref : (1, H, S, E)  v_ref : (1, H, S, D)
    o_ref : (1, BQ, H*D)   attn_ref : (1, H, BQ, S)
    """
    S = k_ref.shape[2]
    H = q_ref.shape[1]
    D = v_ref.shape[3]

    q = q_ref[0] * scale                                        # fold scale into Q
    k = k_ref[0]
    v = v_ref[0]
    if matmul_dtype is not None:
        q = q.astype(matmul_dtype)
        k = k.astype(matmul_dtype)
        v = v.astype(matmul_dtype)

    s = jnp.einsum("hqe,hke->hqk", q, k,
                   preferred_element_type=jnp.float32)          # (H, BQ, S)

    if mask_flag:
        q_start = pl.program_id(1) * block_q
        row = lax.broadcasted_iota(jnp.int32, (block_q, S), 0) + q_start
        col = lax.broadcasted_iota(jnp.int32, (block_q, S), 1)
        s = jnp.where((col <= row)[None, :, :], s, DEFAULT_MASK_VALUE)

    m = jnp.max(s, axis=-1, keepdims=True)
    p = jnp.exp(s - m)
    inv = pl.reciprocal(jnp.sum(p, axis=-1, keepdims=True), approx=False)

    pv = p.astype(matmul_dtype) if matmul_dtype is not None else p
    o = jnp.einsum("hqk,hkd->hqd", pv, v,
                   preferred_element_type=jnp.float32) * inv    # (H, BQ, D)

    attn_ref[0] = (p * inv).astype(attn_ref.dtype)
    for h in range(H):
        o_ref[0, :, h * D:(h + 1) * D] = o[h].astype(o_ref.dtype)


# --------------------------------------------------------------------------
# Wrapper
# --------------------------------------------------------------------------
def full_attention_forward(queries, keys, values, *, mask_flag=True, scale=None,
                           output_attention=False, block_q=None, block_k=None,
                           matmul_dtype=jnp.bfloat16, vmem_limit_bytes=None):
    """Pallas implementation of FullAttention.forward (attn_mask=None path).

    queries: (B, L, H, E), keys: (B, S, H, E), values: (B, S, H, D).
    Returns (V, A) with V: (B, L, H, D) and A: (B, H, L, S) or None.
    block_q defaults to 128 (use 256 on v6e/v7x when L allows);
    block_k defaults to 512 for the flash (output_attention=False) path.
    """
    B, L, H, E = queries.shape
    _, S, _, D = values.shape
    scale = float(scale) if scale is not None else 1.0 / math.sqrt(E)
    if mask_flag:
        # TriangularCausalMask in the PyTorch module is (L, L) -> self-attn only.
        assert S == L, "mask_flag=True (causal) requires S == L"

    block_q = _pick_block(L, block_q if block_q is not None else 128)
    n_q = L // block_q

    # Host-side layout plumbing: head-leading so the kernel needs no transposes.
    # TODO(synk): fuse these transposes into the producing projections; for
    # decode-like shapes they are a non-trivial fraction of the HBM traffic.
    q_t = jnp.swapaxes(queries, 1, 2)   # (B, H, L, E)
    k_t = jnp.swapaxes(keys, 1, 2)      # (B, H, S, E)
    v_t = jnp.swapaxes(values, 1, 2)    # (B, H, S, D)

    cp_kwargs = {}
    if vmem_limit_bytes is not None:
        cp_kwargs["vmem_limit_bytes"] = int(vmem_limit_bytes)

    out_flat_sds = jax.ShapeDtypeStruct((B, L, H * D), queries.dtype)

    if output_attention:
        # Full-S path: the normalized attention map needs the global denominator.
        kernel = partial(_full_attention_kernel, scale=scale, mask_flag=mask_flag,
                         block_q=block_q, matmul_dtype=matmul_dtype)
        grid_spec = pltpu.PrefetchScalarGridSpec(
            num_scalar_prefetch=0,
            grid=(B, n_q),
            in_specs=[
                pl.BlockSpec((1, H, block_q, E), lambda b, qi: (b, 0, qi, 0)),
                pl.BlockSpec((1, H, S, E), lambda b, qi: (b, 0, 0, 0)),
                pl.BlockSpec((1, H, S, D), lambda b, qi: (b, 0, 0, 0)),
            ],
            out_specs=(
                pl.BlockSpec((1, block_q, H * D), lambda b, qi: (b, qi, 0)),
                pl.BlockSpec((1, H, block_q, S), lambda b, qi: (b, 0, qi, 0)),
            ),
        )
        out_flat, attn = pl.pallas_call(
            kernel,
            out_shape=(out_flat_sds,
                       jax.ShapeDtypeStruct((B, H, L, S), queries.dtype)),
            grid_spec=grid_spec,
            compiler_params=pltpu.CompilerParams(
                dimension_semantics=("parallel", "parallel"), **cp_kwargs),
        )(q_t, k_t, v_t)
        return out_flat.reshape(B, L, H, D), attn

    # Flash path (default): KV-tiled online softmax, VMEM independent of S.
    block_k = _pick_block(S, block_k if block_k is not None else 512)
    n_k = S // block_k
    kernel = partial(_flash_attention_kernel, scale=scale, mask_flag=mask_flag,
                     block_q=block_q, block_k=block_k, matmul_dtype=matmul_dtype)
    grid_spec = pltpu.PrefetchScalarGridSpec(
        num_scalar_prefetch=0,
        grid=(B, n_q, n_k),
        in_specs=[
            pl.BlockSpec((1, H, block_q, E), lambda b, qi, ki: (b, 0, qi, 0)),
            pl.BlockSpec((1, H, block_k, E), lambda b, qi, ki: (b, 0, ki, 0)),
            pl.BlockSpec((1, H, block_k, D), lambda b, qi, ki: (b, 0, ki, 0)),
        ],
        out_specs=pl.BlockSpec((1, block_q, H * D), lambda b, qi, ki: (b, qi, 0)),
        scratch_shapes=[
            pltpu.VMEM((H, block_q, 1), jnp.float32),   # running max
            pltpu.VMEM((H, block_q, 1), jnp.float32),   # running denom
            pltpu.VMEM((H, block_q, D), jnp.float32),   # running output
        ],
    )
    out_flat = pl.pallas_call(
        kernel,
        out_shape=out_flat_sds,
        grid_spec=grid_spec,
        compiler_params=pltpu.CompilerParams(
            dimension_semantics=("parallel", "parallel", "arbitrary"), **cp_kwargs),
    )(q_t, k_t, v_t)
    return out_flat.reshape(B, L, H, D), None


# --------------------------------------------------------------------------
# Pure-JAX reference (eval-mode PyTorch FullAttention)
# --------------------------------------------------------------------------
def reference_forward(queries, keys, values, *, mask_flag=True, scale=None):
    B, L, H, E = queries.shape
    S = keys.shape[1]
    scale = scale or 1.0 / math.sqrt(E)
    scores = jnp.einsum("blhe,bshe->bhls", queries, keys)
    if mask_flag:
        mask = jnp.triu(jnp.ones((L, S), bool), k=1)
        scores = jnp.where(mask[None, None], -jnp.inf, scores)
    A = jax.nn.softmax(scale * scores, axis=-1)
    V = jnp.einsum("bhls,bshd->blhd", A, values)
    return V, A


if __name__ == "__main__":
    # Small shapes consistent with the module's [B, L, H, E] convention.
    B, L, H, E = 2, 16, 4, 32
    D = 32

    key = jax.random.PRNGKey(0)
    kq, kk, kv = jax.random.split(key, 3)
    queries = jax.random.normal(kq, (B, L, H, E), jnp.float32)
    keys = jax.random.normal(kk, (B, L, H, E), jnp.float32)
    values = jax.random.normal(kv, (B, L, H, D), jnp.float32)

    out_ref_c, attn_ref_c = reference_forward(queries, keys, values, mask_flag=True)
    out_ref_n, attn_ref_n = reference_forward(queries, keys, values, mask_flag=False)

    # 1) Module defaults: causal, no attention map, flash path, bf16 MXU operands.
    out, attn = full_attention_forward(queries, keys, values,
                                       mask_flag=True, output_attention=False)
    out = jax.block_until_ready(out)
    assert attn is None
    assert out.shape == (B, L, H, D)
    assert jnp.allclose(out, out_ref_c, atol=1e-1, rtol=1e-1)

    # 2) Same path with f32 MXU operands: tight numerical check.
    out32, _ = full_attention_forward(queries, keys, values, mask_flag=True,
                                      output_attention=False, matmul_dtype=None)
    out32 = jax.block_until_ready(out32)
    assert jnp.allclose(out32, out_ref_c, atol=1e-4, rtol=1e-4)

    # 3) Multi-tile flash grid (n_q=2, n_k=2) exercising online softmax and the
    #    causal KV-tile skip, f32 for the tight check.
    out_mt, _ = full_attention_forward(queries, keys, values, mask_flag=True,
                                       output_attention=False, matmul_dtype=None,
                                       block_q=8, block_k=8)
    out_mt = jax.block_until_ready(out_mt)
    assert jnp.allclose(out_mt, out_ref_c, atol=1e-4, rtol=1e-4)

    # 4) No mask + attention maps requested (full-S path).
    out2, attn2 = full_attention_forward(queries, keys, values, mask_flag=False,
                                         output_attention=True, matmul_dtype=None)
    out2 = jax.block_until_ready(out2)
    attn2 = jax.block_until_ready(attn2)
    assert jnp.allclose(out2, out_ref_n, atol=1e-4, rtol=1e-4)
    assert jnp.allclose(attn2, attn_ref_n, atol=1e-4, rtol=1e-4)

    # 5) Causal + attention maps (full-S path with mask).
    out3, attn3 = full_attention_forward(queries, keys, values, mask_flag=True,
                                         output_attention=True, matmul_dtype=None)
    out3 = jax.block_until_ready(out3)
    attn3 = jax.block_until_ready(attn3)
    assert jnp.allclose(out3, out_ref_c, atol=1e-4, rtol=1e-4)
    assert jnp.allclose(attn3, attn_ref_c, atol=1e-4, rtol=1e-4)

    print("KERNEL_OK")
</pallas_src>

<mosaic_0001>
module attributes {stable_mosaic.version = 11 : i64} {
  func.func @_flash_attention_kernel(%arg0: i32, %arg1: i32, %arg2: i32, %arg3: memref<1x4x16x32xf32, #tpu.memory_space<vmem>>, %arg4: memref<1x4x16x32xf32, #tpu.memory_space<vmem>>, %arg5: memref<1x4x16x32xf32, #tpu.memory_space<vmem>>, %arg6: memref<1x16x128xf32, #tpu.memory_space<vmem>>, %arg7: memref<4x16x1xf32, #tpu.memory_space<vmem>>, %arg8: memref<4x16x1xf32, #tpu.memory_space<vmem>>, %arg9: memref<4x16x32xf32, #tpu.memory_space<vmem>>) attributes {dimension_semantics = [#tpu.dimension_semantics<parallel>, #tpu.dimension_semantics<parallel>, #tpu.dimension_semantics<arbitrary>], iteration_bounds = array<i64: 2, 1, 1>, scalar_prefetch = 0 : i64, scratch_operands = 3 : i64, tpu.core_type = #tpu.core_type<tc>, window_params = [{transform_indices = @transform_0, window_bounds = array<i64: 1, 4, 16, 32>}, {transform_indices = @transform_1, window_bounds = array<i64: 1, 4, 16, 32>}, {transform_indices = @transform_2, window_bounds = array<i64: 1, 4, 16, 32>}, {transform_indices = @transform_3, window_bounds = array<i64: 1, 16, 128>}]} {
    %c16_i32 = arith.constant 16 : i32
    %0 = arith.muli %arg1, %c16_i32 : i32
    %c16_i32_0 = arith.constant 16 : i32
    %1 = arith.muli %arg2, %c16_i32_0 : i32
    %c0_i32 = arith.constant 0 : i32
    %2 = arith.cmpi eq, %arg2, %c0_i32 : i32
    %3 = arith.extui %2 : i1 to i32
    %c0_i32_1 = arith.constant 0 : i32
    %4 = arith.cmpi ne, %3, %c0_i32_1 : i32
    scf.if %4 {
      %cst = arith.constant -2.38197633E+38 : f32
      %12 = vector.broadcast %cst : f32 to vector<4x16x1xf32>
      %c0 = arith.constant 0 : index
      %c0_5 = arith.constant 0 : index
      %c0_6 = arith.constant 0 : index
      %13 = vector.load %arg7[%c0, %c0_5, %c0_6] : memref<4x16x1xf32, #tpu.memory_space<vmem>>, vector<4x16x1xf32>
      tpu.vector_store %arg7[%c0, %c0_5, %c0_6], %12 {strides = array<i32>} : memref<4x16x1xf32, #tpu.memory_space<vmem>>, vector<4x16x1xf32>,
      %cst_7 = arith.constant 0.000000e+00 : f32
      %14 = vector.broadcast %cst_7 : f32 to vector<4x16x1xf32>
      %c0_8 = arith.constant 0 : index
      %c0_9 = arith.constant 0 : index
      %c0_10 = arith.constant 0 : index
      %15 = vector.load %arg8[%c0_8, %c0_9, %c0_10] : memref<4x16x1xf32, #tpu.memory_space<vmem>>, vector<4x16x1xf32>
      tpu.vector_store %arg8[%c0_8, %c0_9, %c0_10], %14 {strides = array<i32>} : memref<4x16x1xf32, #tpu.memory_space<vmem>>, vector<4x16x1xf32>,
      %cst_11 = arith.constant 0.000000e+00 : f32
      %16 = vector.broadcast %cst_11 : f32 to vector<4x16x32xf32>
      %c0_12 = arith.constant 0 : index
      %c0_13 = arith.constant 0 : index
      %c0_14 = arith.constant 0 : index
      %17 = vector.load %arg9[%c0_12, %c0_13, %c0_14] : memref<4x16x32xf32, #tpu.memory_space<vmem>>, vector<4x16x32xf32>
      tpu.vector_store %arg9[%c0_12, %c0_13, %c0_14], %16 {strides = array<i32>} : memref<4x16x32xf32, #tpu.memory_space<vmem>>, vector<4x16x32xf32>,
    } else {
    }
    %c15_i32 = arith.constant 15 : i32
    %5 = arith.addi %0, %c15_i32 : i32
    %6 = arith.cmpi sle, %1, %5 : i32
    %7 = arith.extui %6 : i1 to i32
    %c0_i32_2 = arith.constant 0 : i32
    %8 = arith.cmpi ne, %7, %c0_i32_2 : i32
    scf.if %8 {
      %c0 = arith.constant 0 : index
      %c0_5 = arith.constant 0 : index
      %c0_6 = arith.constant 0 : index
      %c0_7 = arith.constant 0 : index
      %12 = vector.load %arg3[%c0, %c0_5, %c0_6, %c0_7] : memref<1x4x16x32xf32, #tpu.memory_space<vmem>>, vector<1x4x16x32xf32>
      %13 = vector.shape_cast %12 : vector<1x4x16x32xf32> to vector<4x16x32xf32>
      %cst = arith.constant 0.176776692 : f32
      %14 = vector.broadcast %cst : f32 to vector<4x16x32xf32>
      %15 = arith.mulf %13, %14 : vector<4x16x32xf32>
      %c0_8 = arith.constant 0 : index
      %c0_9 = arith.constant 0 : index
      %c0_10 = arith.constant 0 : index
      %c0_11 = arith.constant 0 : index
      %16 = vector.load %arg4[%c0_8, %c0_9, %c0_10, %c0_11] : memref<1x4x16x32xf32, #tpu.memory_space<vmem>>, vector<1x4x16x32xf32>
      %17 = vector.shape_cast %16 : vector<1x4x16x32xf32> to vector<4x16x32xf32>
      %c0_12 = arith.constant 0 : index
      %c0_13 = arith.constant 0 : index
      %c0_14 = arith.constant 0 : index
      %c0_15 = arith.constant 0 : index
      %18 = vector.load %arg5[%c0_12, %c0_13, %c0_14, %c0_15] : memref<1x4x16x32xf32, #tpu.memory_space<vmem>>, vector<1x4x16x32xf32>
      %19 = vector.shape_cast %18 : vector<1x4x16x32xf32> to vector<4x16x32xf32>
      %20 = arith.truncf %15 : vector<4x16x32xf32> to vector<4x16x32xbf16>
      %21 = arith.truncf %17 : vector<4x16x32xf32> to vector<4x16x32xbf16>
      %22 = arith.truncf %19 : vector<4x16x32xf32> to vector<4x16x32xbf16>
      "tpu.trace_start"() <{level = 10 : i32, message = "hqe,hke->hqk"}> : () -> ()
      %cst_16 = arith.constant dense<0.000000e+00> : vector<4x16x16xf32>
      %23 = tpu.matmul %20, %21, %cst_16 {dimension_numbers = #tpu.dot_dimension_numbers<[2], [2], [1], [1], [0, 0, 0, 1, 1, 1], [0], [0]>} : vector<4x16x32xbf16>, vector<4x16x32xbf16>, vector<4x16x16xf32> -> vector<4x16x16xf32>
      "tpu.trace_stop"() : () -> ()
      %24 = tpu.iota {dimensions = array<i32: 0>} : vector<16x16xi32>
      %25 = vector.broadcast %0 : i32 to vector<16x16xi32>
      %26 = arith.addi %24, %25 : vector<16x16xi32>
      %27 = tpu.iota {dimensions = array<i32: 1>} : vector<16x16xi32>
      %28 = vector.broadcast %1 : i32 to vector<16x16xi32>
      %29 = arith.addi %27, %28 : vector<16x16xi32>
      %30 = arith.cmpi sle, %29, %26 : vector<16x16xi32>
      %31 = vector.shape_cast %30 : vector<16x16xi1> to vector<1x16x16xi1>
      %cst_17 = arith.constant -2.38197633E+38 : f32
      %32 = vector.shape_cast %31 : vector<1x16x16xi1> to vector<1x16x16xi1>
      %33 = vector.broadcast %32 : vector<1x16x16xi1> to vector<4x16x16xi1>
      %34 = vector.broadcast %cst_17 : f32 to vector<4x16x16xf32>
      %35 = arith.select %33, %23, %34 : vector<4x16x16xi1>, vector<4x16x16xf32>
      %c0_18 = arith.constant 0 : index
      %c0_19 = arith.constant 0 : index
      %c0_20 = arith.constant 0 : index
      %36 = vector.load %arg7[%c0_18, %c0_19, %c0_20] : memref<4x16x1xf32, #tpu.memory_space<vmem>>, vector<4x16x1xf32>
      %cst_21 = arith.constant dense<0xFF800000> : vector<4x16xf32>
      %37 = vector.multi_reduction <maximumf>, %35, %cst_21 [2] : vector<4x16x16xf32> to vector<4x16xf32>
      %38 = vector.shape_cast %37 : vector<4x16xf32> to vector<4x16x1xf32>
      %39 = arith.maximumf %36, %38 : vector<4x16x1xf32>
      %40 = arith.subf %36, %39 : vector<4x16x1xf32>
      %41 = math.exp %40 : vector<4x16x1xf32>
      %42 = vector.broadcast %39 : vector<4x16x1xf32> to vector<4x16x16xf32>
      %43 = arith.subf %35, %42 : vector<4x16x16xf32>
      %44 = math.exp %43 : vector<4x16x16xf32>
      %c0_22 = arith.constant 0 : index
      %c0_23 = arith.constant 0 : index
      %c0_24 = arith.constant 0 : index
      %45 = vector.load %arg8[%c0_22, %c0_23, %c0_24] : memref<4x16x1xf32, #tpu.memory_space<vmem>>, vector<4x16x1xf32>
      %46 = arith.mulf %41, %45 : vector<4x16x1xf32>
      %cst_25 = arith.constant dense<0.000000e+00> : vector<4x16xf32>
      %47 = vector.multi_reduction <add>, %44, %cst_25 [2] : vector<4x16x16xf32> to vector<4x16xf32>
      %48 = vector.shape_cast %47 : vector<4x16xf32> to vector<4x16x1xf32>
      %49 = arith.addf %46, %48 : vector<4x16x1xf32>
      %c0_26 = arith.constant 0 : index
      %c0_27 = arith.constant 0 : index
      %c0_28 = arith.constant 0 : index
      %50 = vector.load %arg8[%c0_26, %c0_27, %c0_28] : memref<4x16x1xf32, #tpu.memory_space<vmem>>, vector<4x16x1xf32>
      tpu.vector_store %arg8[%c0_26, %c0_27, %c0_28], %49 {strides = array<i32>} : memref<4x16x1xf32, #tpu.memory_space<vmem>>, vector<4x16x1xf32>,
      %51 = arith.truncf %44 : vector<4x16x16xf32> to vector<4x16x16xbf16>
      %c0_29 = arith.constant 0 : index
      %c0_30 = arith.constant 0 : index
      %c0_31 = arith.constant 0 : index
      %52 = vector.load %arg9[%c0_29, %c0_30, %c0_31] : memref<4x16x32xf32, #tpu.memory_space<vmem>>, vector<4x16x32xf32>
      %53 = vector.broadcast %41 : vector<4x16x1xf32> to vector<4x16x32xf32>
      %54 = arith.mulf %53, %52 : vector<4x16x32xf32>
      "tpu.trace_start"() <{level = 10 : i32, message = "hqk,hkd->hqd"}> : () -> ()
      %cst_32 = arith.constant dense<0.000000e+00> : vector<4x16x32xf32>
      %55 = tpu.matmul %51, %22, %cst_32 {dimension_numbers = #tpu.dot_dimension_numbers<[2], [1], [1], [2], [0, 0, 0, 1, 1, 2], [0], [0]>} : vector<4x16x16xbf16>, vector<4x16x32xbf16>, vector<4x16x32xf32> -> vector<4x16x32xf32>
      "tpu.trace_stop"() : () -> ()
      %56 = arith.addf %54, %55 : vector<4x16x32xf32>
      %c0_33 = arith.constant 0 : index
      %c0_34 = arith.constant 0 : index
      %c0_35 = arith.constant 0 : index
      %57 = vector.load %arg9[%c0_33, %c0_34, %c0_35] : memref<4x16x32xf32, #tpu.memory_space<vmem>>, vector<4x16x32xf32>
      tpu.vector_store %arg9[%c0_33, %c0_34, %c0_35], %56 {strides = array<i32>} : memref<4x16x32xf32, #tpu.memory_space<vmem>>, vector<4x16x32xf32>,
      %c0_36 = arith.constant 0 : index
      %c0_37 = arith.constant 0 : index
      %c0_38 = arith.constant 0 : index
      %58 = vector.load %arg7[%c0_36, %c0_37, %c0_38] : memref<4x16x1xf32, #tpu.memory_space<vmem>>, vector<4x16x1xf32>
      tpu.vector_store %arg7[%c0_36, %c0_37, %c0_38], %39 {strides = array<i32>} : memref<4x16x1xf32, #tpu.memory_space<vmem>>, vector<4x16x1xf32>,
    } else {
    }
    %c0_i32_3 = arith.constant 0 : i32
    %9 = arith.cmpi eq, %arg2, %c0_i32_3 : i32
    %10 = arith.extui %9 : i1 to i32
    %c0_i32_4 = arith.constant 0 : i32
    %11 = arith.cmpi ne, %10, %c0_i32_4 : i32
    scf.if %11 {
      %c0 = arith.constant 0 : index
      %c0_5 = arith.constant 0 : index
      %c0_6 = arith.constant 0 : index
      %12 = vector.load %arg8[%c0, %c0_5, %c0_6] : memref<4x16x1xf32, #tpu.memory_space<vmem>>, vector<4x16x1xf32>
      %13 = tpu.reciprocal %12 : vector<4x16x1xf32> -> vector<4x16x1xf32>
      %c0_7 = arith.constant 0 : index
      %c0_8 = arith.constant 0 : index
      %c0_9 = arith.constant 0 : index
      %14 = vector.load %arg9[%c0_7, %c0_8, %c0_9] : memref<4x16x32xf32, #tpu.memory_space<vmem>>, vector<4x16x32xf32>
      %15 = vector.broadcast %13 : vector<4x16x1xf32> to vector<4x16x32xf32>
      %16 = arith.mulf %14, %15 : vector<4x16x32xf32>
      %17 = vector.extract_strided_slice %16 {offsets = [0, 0, 0], sizes = [1, 16, 32], strides = [1, 1, 1]} : vector<4x16x32xf32> to vector<1x16x32xf32>
      %18 = vector.shape_cast %17 : vector<1x16x32xf32> to vector<16x32xf32>
      %c0_10 = arith.constant 0 : index
      %c0_11 = arith.constant 0 : index
      %c0_12 = arith.constant 0 : index
      %19 = vector.load %arg6[%c0_10, %c0_11, %c0_12] : memref<1x16x128xf32, #tpu.memory_space<vmem>>, vector<1x16x32xf32>
      %20 = vector.shape_cast %19 : vector<1x16x32xf32> to vector<16x32xf32>
      %21 = vector.shape_cast %18 : vector<16x32xf32> to vector<1x16x32xf32>
      tpu.vector_store %arg6[%c0_10, %c0_11, %c0_12], %21 {strides = array<i32>} : memref<1x16x128xf32, #tpu.memory_space<vmem>>, vector<1x16x32xf32>,
      %22 = vector.extract_strided_slice %16 {offsets = [1, 0, 0], sizes = [1, 16, 32], strides = [1, 1, 1]} : vector<4x16x32xf32> to vector<1x16x32xf32>
      %23 = vector.shape_cast %22 : vector<1x16x32xf32> to vector<16x32xf32>
      %c0_13 = arith.constant 0 : index
      %c0_14 = arith.constant 0 : index
      %c32 = arith.constant 32 : index
      %24 = vector.load %arg6[%c0_13, %c0_14, %c32] : memref<1x16x128xf32, #tpu.memory_space<vmem>>, vector<1x16x32xf32>
      %25 = vector.shape_cast %24 : vector<1x16x32xf32> to vector<16x32xf32>
      %26 = vector.shape_cast %23 : vector<16x32xf32> to vector<1x16x32xf32>
      tpu.vector_store %arg6[%c0_13, %c0_14, %c32], %26 {strides = array<i32>} : memref<1x16x128xf32, #tpu.memory_space<vmem>>, vector<1x16x32xf32>,
      %27 = vector.extract_strided_slice %16 {offsets = [2, 0, 0], sizes = [1, 16, 32], strides = [1, 1, 1]} : vector<4x16x32xf32> to vector<1x16x32xf32>
      %28 = vector.shape_cast %27 : vector<1x16x32xf32> to vector<16x32xf32>
      %c0_15 = arith.constant 0 : index
      %c0_16 = arith.constant 0 : index
      %c64 = arith.constant 64 : index
      %29 = vector.load %arg6[%c0_15, %c0_16, %c64] : memref<1x16x128xf32, #tpu.memory_space<vmem>>, vector<1x16x32xf32>
      %30 = vector.shape_cast %29 : vector<1x16x32xf32> to vector<16x32xf32>
      %31 = vector.shape_cast %28 : vector<16x32xf32> to vector<1x16x32xf32>
      tpu.vector_store %arg6[%c0_15, %c0_16, %c64], %31 {strides = array<i32>} : memref<1x16x128xf32, #tpu.memory_space<vmem>>, vector<1x16x32xf32>,
      %32 = vector.extract_strided_slice %16 {offsets = [3, 0, 0], sizes = [1, 16, 32], strides = [1, 1, 1]} : vector<4x16x32xf32> to vector<1x16x32xf32>
      %33 = vector.shape_cast %32 : vector<1x16x32xf32> to vector<16x32xf32>
      %c0_17 = arith.constant 0 : index
      %c0_18 = arith.constant 0 : index
      %c96 = arith.constant 96 : index
      %34 = vector.load %arg6[%c0_17, %c0_18, %c96] : memref<1x16x128xf32, #tpu.memory_space<vmem>>, vector<1x16x32xf32>
      %35 = vector.shape_cast %34 : vector<1x16x32xf32> to vector<16x32xf32>
      %36 = vector.shape_cast %33 : vector<16x32xf32> to vector<1x16x32xf32>
      tpu.vector_store %arg6[%c0_17, %c0_18, %c96], %36 {strides = array<i32>} : memref<1x16x128xf32, #tpu.memory_space<vmem>>, vector<1x16x32xf32>,
    } else {
    }
    return
  }
  func.func @transform_0(%arg0: i32, %arg1: i32, %arg2: i32) -> (i32, i32, i32, i32) {
    %c0_i32 = arith.constant 0 : i32
    %c0_i32_0 = arith.constant 0 : i32
    %c0_i32_1 = arith.constant 0 : i32
    return %arg0, %c0_i32, %arg1, %c0_i32_0 : i32, i32, i32, i32
  }
  func.func @transform_1(%arg0: i32, %arg1: i32, %arg2: i32) -> (i32, i32, i32, i32) {
    %c0_i32 = arith.constant 0 : i32
    %c0_i32_0 = arith.constant 0 : i32
    %c0_i32_1 = arith.constant 0 : i32
    return %arg0, %c0_i32, %arg2, %c0_i32_0 : i32, i32, i32, i32
  }
  func.func @transform_2(%arg0: i32, %arg1: i32, %arg2: i32) -> (i32, i32, i32, i32) {
    %c0_i32 = arith.constant 0 : i32
    %c0_i32_0 = arith.constant 0 : i32
    %c0_i32_1 = arith.constant 0 : i32
    return %arg0, %c0_i32, %arg2, %c0_i32_0 : i32, i32, i32, i32
  }
  func.func @transform_3(%arg0: i32, %arg1: i32, %arg2: i32) -> (i32, i32, i32) {
    %c0_i32 = arith.constant 0 : i32
    %c0_i32_0 = arith.constant 0 : i32
    return %arg0, %arg1, %c0_i32 : i32, i32, i32
  }
}

</mosaic_0001>

<llo_original>
// kernel: tpu_custom_call.1
$region0: #{tpu_custom_call.1}
  #allocation0 [shape = 'u32[]', space=smem, size = 0x4, offset = 0x4, fixed_abs, tag = 'smem constant byte address 0x4 - core index']
  #allocation1 [shape = 'u32[144,128]{1,0:T(1,128)}', space=vmem, size = 0x12000, scoped, tag = 'internal scratch']
  #allocation2 [shape = 'f32[4,16,1]{2,1,0:T(8,128)}', space=vmem, size = 0x8000, scoped, tag = 'scratch operand']
  #allocation3 [shape = 'f32[4,16,1]{2,1,0:T(8,128)}', space=vmem, size = 0x8000, scoped, tag = 'scratch operand']
  #allocation4 [shape = 'f32[4,16,32]{2,1,0:T(8,128)}', space=vmem, size = 0x8000, scoped, tag = 'scratch operand']
  %s0 = inlined_call_operand.hbm [shape: f32[2,4,16,32], index: 0, kind: input, shape index: {}]
  %s1 = inlined_call_operand.hbm [shape: f32[2,4,16,32], index: 1, kind: input, shape index: {}]
  %s2 = inlined_call_operand.hbm [shape: f32[2,4,16,32], index: 2, kind: input, shape index: {}]
  %s3 = inlined_call_operand.hbm [shape: f32[2,16,128], index: 3, kind: output, shape index: {}]
  %s4 = sld [smem:[#allocation0]]
  $region69: #{tpu_custom_call.1} parent=0
    _
  %s6 = ssub.s32 1, %s4
  %s7 = scalar_select 0, %s6, %s4
  $region1: #{tpu_custom_call.1} parent=0
    #allocation5 [shape = 'u8[65536]{0}', space=vmem, size = 0x10000, scoped, tag = 'input window, operand 0']
    #allocation6 [shape = 's32[2]{0}', space=sflag, size = 0x8, scoped, tag = 'scoped memory for tpu_custom_call.1']
    #allocation7 [shape = 's32[2]{0}', space=sflag, size = 0x8, scoped, tag = 'scoped memory for tpu_custom_call.1']
    #allocation8 [shape = 'u8[65536]{0}', space=vmem, size = 0x10000, scoped, tag = 'input window, operand 1']
    #allocation9 [shape = 's32[2]{0}', space=sflag, size = 0x8, scoped, tag = 'scoped memory for tpu_custom_call.1']
    #allocation10 [shape = 'u8[65536]{0}', space=vmem, size = 0x10000, scoped, tag = 'input window, operand 2']
    #allocation11 [shape = 'u8[16384]{0}', space=vmem, size = 0x4000, scoped, tag = 'output window, operand 0']
    %8 = vsyncpa [#allocation6], 0
    %s9 = scalar_lea.sflag [#allocation6], 1
    %10 = vsyncpa %s9, 0
    %11 = vsyncpa [#allocation9], 0
    %s12 = scalar_lea.sflag [#allocation9], 1
    %13 = vsyncpa %s12, 0
    %14 = vsyncpa [#allocation7], 0
    %s15 = scalar_lea.sflag [#allocation7], 1
    %16 = vsyncpa %s15, 0
    loop: start=0, step=1, limit=4
    $region2: #{tpu_custom_call.1} parent=1 // loop_pre_header
      _
    $region3: #{tpu_custom_call.1} parent=1 // loop_header
      %s18 = sphi 0, %s22
      %p19 = scmp.ge.s32.totalorder %s18, 4
      %s25 = sphi 0, %s44
      %s26 = sphi 0, %s40
      %s27 = sphi 0, %s36
      %s28 = sphi 0, %s25
      %s29 = sphi 0, %s26
      %s30 = sphi 0, %s27
      %s31 = sphi 0, %s28
      %s32 = sphi 0, %s29
      %s33 = sphi 0, %s30
      %s49 = sphi 0, %s51
      %s52 = sphi 0, %s49
      %s53 = sphi 0, %s52
      %s69 = sphi 0, %s53
      %s77 = sphi 0, %s79
      %s80 = sphi 0, %s77
      %s81 = sphi 0, %s80
      %s97 = sphi 0, %s81
      %s105 = sphi 0, %s107
      %s108 = sphi 0, %s105
      %s109 = sphi 0, %s108
      %s125 = sphi 0, %s109
      %s133 = sphi 0, %s135
      %s136 = sphi 0, %s133
      %s137 = sphi 0, %s136
      %s153 = sphi 0, %s137
    $region4: #{tpu_custom_call.1} parent=1 // loop_header_branch
      %21 = sbr.rel (%p19) target = $region8
    $region5: #{tpu_custom_call.1} parent=1 // loop_body
      %s23 = ssub.s32 %s18, 1
      %s24 = ssub.s32 %s18, 2
      %s34 = sadd.s32 1, %s27
      %p35 = scmp.ge.s32.totalorder %s34, 1
      %s36 = scalar_select %p35, 0, %s34
      %s37 = sadd.s32 1, %s26
      %s38 = scalar_select %p35, %s37, %s26
      %p39 = scmp.ge.s32.totalorder %s38, 1
      %s40 = scalar_select %p39, 0, %s38
      %s41 = sadd.s32 1, %s25
      %s42 = scalar_select %p39, %s41, %s25
      %p43 = scmp.ge.s32.totalorder %s42, 2
      %s44 = scalar_select %p43, 0, %s42
      %s45 = ssub.s32 %s25, %s44
      %s46 = ssub.s32 %s26, %s40
      %s47 = sor.u32 %s45, %s46
      %p48 = scmp.eq.s32.totalorder %s47, 0
      %s50 = sadd.s32 %s49, 1
      %s51 = scalar_select %p48, %s49, %s50
      %p54 = pneg %p48
      %p55 = scmp.eq.s32.totalorder %s18, 1
      %p56 = por %p54, %p55
      %p57 = scmp.ne.s32.totalorder %s49, %s52
      %p58 = scmp.eq.s32.totalorder %s18, 0
      %p59 = por %p57, %p58
      %p60 = scmp.ne.s32.totalorder %s49, %s52
      %p61 = scmp.eq.s32.totalorder %s23, 1
      %p62 = por %p60, %p61
      %p63 = scmp.ne.s32.totalorder %s52, %s53
      %p64 = scmp.eq.s32.totalorder %s23, 0
      %p65 = por %p63, %p64
      %p66 = scmp.ne.s32.totalorder %s52, %s53
      %p67 = scmp.eq.s32.totalorder %s24, 1
      %p68 = por %p66, %p67
      %p70 = scmp.ne.s32.totalorder %s53, %s69
      %p71 = scmp.eq.s32.totalorder %s24, 0
      %p72 = por %p70, %p71
      %s73 = ssub.s32 %s25, %s44
      %s74 = ssub.s32 %s27, %s36
      %s75 = sor.u32 %s73, %s74
      %p76 = scmp.eq.s32.totalorder %s75, 0
      %s78 = sadd.s32 %s77, 1
      %s79 = scalar_select %p76, %s77, %s78
      %p82 = pneg %p76
      %p83 = scmp.eq.s32.totalorder %s18, 1
      %p84 = por %p82, %p83
      %p85 = scmp.ne.s32.totalorder %s77, %s80
      %p86 = scmp.eq.s32.totalorder %s18, 0
      %p87 = por %p85, %p86
      %p88 = scmp.ne.s32.totalorder %s77, %s80
      %p89 = scmp.eq.s32.totalorder %s23, 1
      %p90 = por %p88, %p89
      %p91 = scmp.ne.s32.totalorder %s80, %s81
      %p92 = scmp.eq.s32.totalorder %s23, 0
      %p93 = por %p91, %p92
      %p94 = scmp.ne.s32.totalorder %s80, %s81
      %p95 = scmp.eq.s32.totalorder %s24, 1
      %p96 = por %p94, %p95
      %p98 = scmp.ne.s32.totalorder %s81, %s97
      %p99 = scmp.eq.s32.totalorder %s24, 0
      %p100 = por %p98, %p99
      %s101 = ssub.s32 %s25, %s44
      %s102 = ssub.s32 %s27, %s36
      %s103 = sor.u32 %s101, %s102
      %p104 = scmp.eq.s32.totalorder %s103, 0
      %s106 = sadd.s32 %s105, 1
      %s107 = scalar_select %p104, %s105, %s106
      %p110 = pneg %p104
      %p111 = scmp.eq.s32.totalorder %s18, 1
      %p112 = por %p110, %p111
      %p113 = scmp.ne.s32.totalorder %s105, %s108
      %p114 = scmp.eq.s32.totalorder %s18, 0
      %p115 = por %p113, %p114
      %p116 = scmp.ne.s32.totalorder %s105, %s108
      %p117 = scmp.eq.s32.totalorder %s23, 1
      %p118 = por %p116, %p117
      %p119 = scmp.ne.s32.totalorder %s108, %s109
      %p120 = scmp.eq.s32.totalorder %s23, 0
      %p121 = por %p119, %p120
      %p122 = scmp.ne.s32.totalorder %s108, %s109
      %p123 = scmp.eq.s32.totalorder %s24, 1
      %p124 = por %p122, %p123
      %p126 = scmp.ne.s32.totalorder %s109, %s125
      %p127 = scmp.eq.s32.totalorder %s24, 0
      %p128 = por %p126, %p127
      %s129 = ssub.s32 %s25, %s44
      %s130 = ssub.s32 %s26, %s40
      %s131 = sor.u32 %s129, %s130
      %p132 = scmp.eq.s32.totalorder %s131, 0
      %s134 = sadd.s32 %s133, 1
      %s135 = scalar_select %p132, %s133, %s134
      %p138 = pneg %p132
      %p139 = scmp.eq.s32.totalorder %s18, 1
      %p140 = por %p138, %p139
      %p141 = scmp.ne.s32.totalorder %s133, %s136
      %p142 = scmp.eq.s32.totalorder %s18, 0
      %p143 = por %p141, %p142
      %p144 = scmp.ne.s32.totalorder %s133, %s136
      %p145 = scmp.eq.s32.totalorder %s23, 1
      %p146 = por %p144, %p145
      %p147 = scmp.ne.s32.totalorder %s136, %s137
      %p148 = scmp.eq.s32.totalorder %s23, 0
      %p149 = por %p147, %p148
      %p150 = scmp.ne.s32.totalorder %s136, %s137
      %p151 = scmp.eq.s32.totalorder %s24, 1
      %p152 = por %p150, %p151
      %p154 = scmp.ne.s32.totalorder %s137, %s153
      %p155 = scmp.eq.s32.totalorder %s24, 0
      %p156 = por %p154, %p155
      %p157 = scmp.le.s32.totalorder 1, %s18
      %p158 = scmp.lt.s32.totalorder %s18, 3
      %p159 = pnand %p157, %p158
      %p160 = pneg %p159
      // Predicated region
      $region9: #{tpu_custom_call.1} parent=5 // pred_check
        _
      $region10: #{tpu_custom_call.1} parent=5 // pred_check_branch
        %162 = sbr.rel (%p159) target = $region12
      $region11: #{tpu_custom_call.1} parent=5 // pred_region
        %s163 = ssub.s32 %s18, 1
      $region12: #{tpu_custom_call.1} parent=5 // pred_fallthru
        _
      %p164 = scmp.lt.s32.totalorder %s18, 2
      // Predicated region
      $region13: #{tpu_custom_call.1} parent=5 // pred_check
        %p165 = pneg %p164
      $region14: #{tpu_custom_call.1} parent=5 // pred_check_branch
        %167 = sbr.rel (%p165) target = $region16
      $region15: #{tpu_custom_call.1} parent=5 // pred_region
        // Predicated region
        $region17: #{tpu_custom_call.1} parent=15 // pred_check
          %p168 = pneg %p59
        $region18: #{tpu_custom_call.1} parent=15 // pred_check_branch
          %170 = sbr.rel (%p168) target = $region20
        $region19: #{tpu_custom_call.1} parent=15 // pred_region
          %s171 = sand.u32 %s49, 1
          %s172 = scalar_lea.sflag [#allocation6], %s171
          %s173 = sand.u32 %s49, 1
          %s174 = smul.addr %s173, 64
          %s175 = scalar_lea.vmem [#allocation5], %s174
          %s176 = smul.u32 2, %s26
          %s178 = ssub.s32 1024, 1024
          %179 = vsyncadd %s172, %s178
          %s180 = smul.addr %s25, 8
          %s181 = sadd.s32 %s176, %s180
          %s182 = smul.addr %s181, 128
          %s183 = scalar_lea.hbm %s0, %s182
          %s184 = sshll.u32 %s175, 4
          %s185 = int_to_ptr.vmem [resolvable:$true] %s184
          %190 = dma.hbm_to_vmem [thread:$0]  %s183, 1024, %s185, %s172, 128, 128, 8
        $region20: #{tpu_custom_call.1} parent=15 // pred_fallthru
          _
        // Predicated region
        $region21: #{tpu_custom_call.1} parent=15 // pred_check
          %p191 = pneg %p87
        $region22: #{tpu_custom_call.1} parent=15 // pred_check_branch
          %193 = sbr.rel (%p191) target = $region24
        $region23: #{tpu_custom_call.1} parent=15 // pred_region
          %s194 = sand.u32 %s18, 1
          %s195 = scalar_lea.sflag [#allocation9], %s194
          %s196 = sand.u32 %s77, 1
          %s197 = smul.addr %s196, 64
          %s198 = scalar_lea.vmem [#allocation8], %s197
          %s199 = smul.u32 2, %s27
          %s201 = ssub.s32 1024, 1024
          %202 = vsyncadd %s195, %s201
          %s203 = smul.addr %s25, 8
          %s204 = sadd.s32 %s199, %s203
          %s205 = smul.addr %s204, 128
          %s206 = scalar_lea.hbm %s1, %s205
          %s207 = sshll.u32 %s198, 4
          %s208 = int_to_ptr.vmem [resolvable:$true] %s207
          %213 = dma.hbm_to_vmem [thread:$0]  %s206, 1024, %s208, %s195, 128, 128, 8
        $region24: #{tpu_custom_call.1} parent=15 // pred_fallthru
          _
        // Predicated region
        $region25: #{tpu_custom_call.1} parent=15 // pred_check
          %p214 = pneg %p115
        $region26: #{tpu_custom_call.1} parent=15 // pred_check_branch
          %216 = sbr.rel (%p214) target = $region28
        $region27: #{tpu_custom_call.1} parent=15 // pred_region
          %s217 = sand.u32 %s18, 1
          %s218 = scalar_lea.sflag [#allocation9], %s217
          %s219 = sand.u32 %s105, 1
          %s220 = smul.addr %s219, 64
          %s221 = scalar_lea.vmem [#allocation10], %s220
          %s222 = smul.u32 2, %s27
          %s224 = ssub.s32 1024, 1024
          %225 = vsyncadd %s218, %s224
          %s226 = smul.addr %s25, 8
          %s227 = sadd.s32 %s222, %s226
          %s228 = smul.addr %s227, 128
          %s229 = scalar_lea.hbm %s2, %s228
          %s230 = sshll.u32 %s221, 4
          %s231 = int_to_ptr.vmem [resolvable:$true] %s230
          %236 = dma.hbm_to_vmem [thread:$0]  %s229, 1024, %s231, %s218, 128, 128, 8
        $region28: #{tpu_custom_call.1} parent=15 // pred_fallthru
          _
      $region16: #{tpu_custom_call.1} parent=5 // pred_fallthru
        _
      %p237 = scmp.le.s32.totalorder 1, %s18
      %p238 = scmp.lt.s32.totalorder %s18, 3
      %p239 = pnand %p237, %p238
      %p240 = pneg %p239
      // Predicated region
      $region29: #{tpu_custom_call.1} parent=5 // pred_check
        _
      $region30: #{tpu_custom_call.1} parent=5 // pred_check_branch
        %242 = sbr.rel (%p239) target = $region32
      $region31: #{tpu_custom_call.1} parent=5 // pred_region
        %s243 = ssub.s32 %s18, 1
        %s244 = sand.u32 %s52, 1
        %s245 = scalar_lea.sflag [#allocation6], %s244
        %s246 = sand.u32 %s52, 1
        %s247 = smul.addr %s246, 64
        %s248 = scalar_lea.vmem [#allocation5], %s247
        // Predicated region
        $region33: #{tpu_custom_call.1} parent=31 // pred_check
          %p249 = pneg %p65
        $region34: #{tpu_custom_call.1} parent=31 // pred_check_branch
          %251 = sbr.rel (%p249) target = $region36
        $region35: #{tpu_custom_call.1} parent=31 // pred_region
          %252 = dma.done %s245, 1024
        $region36: #{tpu_custom_call.1} parent=31 // pred_fallthru
          _
        %s253 = sand.u32 %s23, 1
        %s254 = scalar_lea.sflag [#allocation9], %s253
        %s255 = sand.u32 %s80, 1
        %s256 = smul.addr %s255, 64
        %s257 = scalar_lea.vmem [#allocation8], %s256
        // Predicated region
        $region37: #{tpu_custom_call.1} parent=31 // pred_check
          %p258 = pneg %p93
        $region38: #{tpu_custom_call.1} parent=31 // pred_check_branch
          %260 = sbr.rel (%p258) target = $region40
        $region39: #{tpu_custom_call.1} parent=31 // pred_region
          %261 = dma.done %s254, 1024
        $region40: #{tpu_custom_call.1} parent=31 // pred_fallthru
          _
        %s262 = sand.u32 %s23, 1
        %s263 = scalar_lea.sflag [#allocation9], %s262
        %s264 = sand.u32 %s108, 1
        %s265 = smul.addr %s264, 64
        %s266 = scalar_lea.vmem [#allocation10], %s265
        // Predicated region
        $region41: #{tpu_custom_call.1} parent=31 // pred_check
          %p267 = pneg %p121
        $region42: #{tpu_custom_call.1} parent=31 // pred_check_branch
          %269 = sbr.rel (%p267) target = $region44
        $region43: #{tpu_custom_call.1} parent=31 // pred_region
          %270 = dma.done %s263, 1024
        $region44: #{tpu_custom_call.1} parent=31 // pred_fallthru
          _
        %s271 = sand.u32 %s52, 1
        %s272 = scalar_lea.sflag [#allocation6], %s271
        %s273 = sand.u32 %s52, 1
        %s274 = smul.addr %s273, 64
        %s275 = scalar_lea.vmem [#allocation5], %s274
        %p276 = pneg %p65
        %p277 = pneg %p62
        %s278 = sand.u32 %s23, 1
        %s279 = scalar_lea.sflag [#allocation9], %s278
        %s280 = sand.u32 %s80, 1
        %s281 = smul.addr %s280, 64
        %s282 = scalar_lea.vmem [#allocation8], %s281
        %p283 = pneg %p93
        %p284 = pneg %p90
        %s285 = sand.u32 %s23, 1
        %s286 = scalar_lea.sflag [#allocation9], %s285
        %s287 = sand.u32 %s108, 1
        %s288 = smul.addr %s287, 64
        %s289 = scalar_lea.vmem [#allocation10], %s288
        %p290 = pneg %p121
        %p291 = pneg %p118
        %p292 = pneg %p149
        %p293 = pneg %p146
        %s294 = sand.u32 %s136, 1
        %s295 = scalar_lea.sflag [#allocation7], %s294
        %s296 = sand.u32 %s136, 1
        %s297 = smul.addr %s296, 16
        %s298 = scalar_lea.vmem [#allocation11], %s297
        %s299 = smul.u32 2, %s29
        %s300 = smul.u32 2, %s30
        %s301 = smul.u32 2, %s30
        %s302 = smul.u32 2, %s29
        %s304 = smul.u32 %s29, 16
        %s305 = smul.u32 %s30, 16
        %p306 = scmp.eq.s32.totalorder %s30, 0
        // Predicated region
        $region45: #{tpu_custom_call.1} parent=31 // pred_check
          %p307 = pneg %p306
        $region46: #{tpu_custom_call.1} parent=31 // pred_check_branch
          %309 = sbr.rel (%p307) target = $region48
        $region47: #{tpu_custom_call.1} parent=31 // pred_region
          %vm310 = vcmask 7168
          %311 = vst.msk [vmem:[#allocation2] sm:$0xff] %vm310, -2.3819763e+38
          %312 = vst.msk [vmem:[#allocation2 + $0x8] sm:$0xff] %vm310, -2.3819763e+38
          %313 = vst.msk [vmem:[#allocation2 + $0x10] sm:$0xff] %vm310, -2.3819763e+38
          %314 = vst.msk [vmem:[#allocation2 + $0x18] sm:$0xff] %vm310, -2.3819763e+38
          %315 = vst.msk [vmem:[#allocation2 + $0x20] sm:$0xff] %vm310, -2.3819763e+38
          %316 = vst.msk [vmem:[#allocation2 + $0x28] sm:$0xff] %vm310, -2.3819763e+38
          %317 = vst.msk [vmem:[#allocation2 + $0x30] sm:$0xff] %vm310, -2.3819763e+38
          %318 = vst.msk [vmem:[#allocation2 + $0x38] sm:$0xff] %vm310, -2.3819763e+38
          %319 = vst.msk [vmem:[#allocation3] sm:$0xff] %vm310, 0.0
          %320 = vst.msk [vmem:[#allocation3 + $0x8] sm:$0xff] %vm310, 0.0
          %321 = vst.msk [vmem:[#allocation3 + $0x10] sm:$0xff] %vm310, 0.0
          %322 = vst.msk [vmem:[#allocation3 + $0x18] sm:$0xff] %vm310, 0.0
          %323 = vst.msk [vmem:[#allocation3 + $0x20] sm:$0xff] %vm310, 0.0
          %324 = vst.msk [vmem:[#allocation3 + $0x28] sm:$0xff] %vm310, 0.0
          %325 = vst.msk [vmem:[#allocation3 + $0x30] sm:$0xff] %vm310, 0.0
          %326 = vst.msk [vmem:[#allocation3 + $0x38] sm:$0xff] %vm310, 0.0
          %vm327 = vcmask 261120
          %328 = vst.msk [vmem:[#allocation4] sm:$0xff] %vm327, 0.0
          %329 = vst.msk [vmem:[#allocation4 + $0x8] sm:$0xff] %vm327, 0.0
          %330 = vst.msk [vmem:[#allocation4 + $0x10] sm:$0xff] %vm327, 0.0
          %331 = vst.msk [vmem:[#allocation4 + $0x18] sm:$0xff] %vm327, 0.0
          %332 = vst.msk [vmem:[#allocation4 + $0x20] sm:$0xff] %vm327, 0.0
          %333 = vst.msk [vmem:[#allocation4 + $0x28] sm:$0xff] %vm327, 0.0
          %334 = vst.msk [vmem:[#allocation4 + $0x30] sm:$0xff] %vm327, 0.0
          %335 = vst.msk [vmem:[#allocation4 + $0x38] sm:$0xff] %vm327, 0.0
        $region48: #{tpu_custom_call.1} parent=31 // pred_fallthru
          _
        %s336 = sadd.s32 %s304, 15
        %p337 = scmp.le.s32.totalorder %s305, %s336
        // Predicated region
        $region49: #{tpu_custom_call.1} parent=31 // pred_check
          %p338 = pneg %p337
        $region50: #{tpu_custom_call.1} parent=31 // pred_check_branch
          %340 = sbr.rel (%p338) target = $region52
        $region51: #{tpu_custom_call.1} parent=31 // pred_region
          %v341 = vld [vmem:[%s248] sm:$0xff]
          %v342 = vld [vmem:[%s248 + $0x8] sm:$0xff]
          %v343 = vld [vmem:[%s248 + $0x10] sm:$0xff]
          %v344 = vld [vmem:[%s248 + $0x18] sm:$0xff]
          %v345 = vld [vmem:[%s248 + $0x20] sm:$0xff]
          %v346 = vld [vmem:[%s248 + $0x28] sm:$0xff]
          %v347 = vld [vmem:[%s248 + $0x30] sm:$0xff]
          %v348 = vld [vmem:[%s248 + $0x38] sm:$0xff]
          %v349 = vmul.f32 %v341, 0.17677669
          %v350 = vmul.f32 %v342, 0.17677669
          %v351 = vmul.f32 %v343, 0.17677669
          %v352 = vmul.f32 %v344, 0.17677669
          %v353 = vmul.f32 %v345, 0.17677669
          %v354 = vmul.f32 %v346, 0.17677669
          %v355 = vmul.f32 %v347, 0.17677669
          %v356 = vmul.f32 %v348, 0.17677669
          %v357 = vld [vmem:[%s257] sm:$0xff]
          %v358 = vld [vmem:[%s257 + $0x8] sm:$0xff]
          %v359 = vld [vmem:[%s257 + $0x10] sm:$0xff]
          %v360 = vld [vmem:[%s257 + $0x18] sm:$0xff]
          %v361 = vld [vmem:[%s257 + $0x20] sm:$0xff]
          %v362 = vld [vmem:[%s257 + $0x28] sm:$0xff]
          %v363 = vld [vmem:[%s257 + $0x30] sm:$0xff]
          %v364 = vld [vmem:[%s257 + $0x38] sm:$0xff]
          %v365 = vld [vmem:[%s266] sm:$0xff]
          %v366 = vld [vmem:[%s266 + $0x8] sm:$0xff]
          %v367 = vld [vmem:[%s266 + $0x10] sm:$0xff]
          %v368 = vld [vmem:[%s266 + $0x18] sm:$0xff]
          %v369 = vld [vmem:[%s266 + $0x20] sm:$0xff]
          %v370 = vld [vmem:[%s266 + $0x28] sm:$0xff]
          %v371 = vld [vmem:[%s266 + $0x30] sm:$0xff]
          %v372 = vld [vmem:[%s266 + $0x38] sm:$0xff]
          %v373 = vpack.c.bf16 %v350, %v349
          %v374 = vpack.c.bf16 %v352, %v351
          %v375 = vpack.c.bf16 %v354, %v353
          %v376 = vpack.c.bf16 %v356, %v355
          %v377 = vpack.c.bf16 %v358, %v357
          %v378 = vpack.c.bf16 %v360, %v359
          %v379 = vpack.c.bf16 %v362, %v361
          %v380 = vpack.c.bf16 %v364, %v363
          %v381 = vpack.c.bf16 %v366, %v365
          %v382 = vpack.c.bf16 %v368, %v367
          %v383 = vpack.c.bf16 %v370, %v369
          %v384 = vpack.c.bf16 %v372, %v371
          %vm385 = vcmask 261120
          %v387 = vsel %vm385, %v373, 0
          %v390 = vsel %vm385, %v377, 0
          %392 = vmatprep.subr.bf16.mxu0 0
          %393 = vmatpush1.bf16.xpose.msra.mxu0 0
          %394 = vmatprep.subr.bf16.mxu0 0
          %395 = vmatpush1.bf16.xpose.msra.mxu0 0
          %396 = vmatprep.subr.bf16.mxu0 0
          %397 = vmatpush1.bf16.xpose.msra.mxu0 0
          %398 = vmatprep.subr.bf16.mxu0 0
          %399 = vmatpush1.bf16.xpose.msra.mxu0 0
          %400 = vmatprep.subr.bf16.mxu0 0
          %401 = vmatpush1.bf16.xpose.msra.mxu0 0
          %402 = vmatprep.subr.bf16.mxu0 0
          %403 = vmatpush1.bf16.xpose.msra.mxu0 0
          %404 = vmatprep.subr.bf16.mxu0 0
          %405 = vmatpush1.bf16.xpose.msra.mxu0 0
          %406 = vmatprep.subr.bf16.mxu0 0
          %407 = vmatpush1.bf16.xpose.msra.mxu0 %v390
          %408 = vmatprep.subr.bf16.mxu0 0
          %409 = vmatpush2.bf16.xpose.msra.mxu0 0
          %410 = vmatprep.subr.bf16.mxu0 0
          %411 = vmatpush2.bf16.xpose.msra.mxu0 0
          %412 = vmatprep.subr.bf16.mxu0 0
          %413 = vmatpush2.bf16.xpose.msra.mxu0 0
          %414 = vmatprep.subr.bf16.mxu0 0
          %415 = vmatpush2.bf16.xpose.msra.mxu0 0
          %416 = vmatprep.subr.bf16.mxu0 0
          %417 = vmatpush2.bf16.xpose.msra.mxu0 0
          %418 = vmatprep.subr.bf16.mxu0 0
          %419 = vmatpush2.bf16.xpose.msra.mxu0 0
          %420 = vmatprep.subr.bf16.mxu0 0
          %421 = vmatpush2.bf16.xpose.msra.mxu0 0
          %422 = vmatprep.subr.bf16.mxu0 0
          %423 = vmatpush2.bf16.xpose.msra.mxu0 0
          %424 = vmatprep.mubr.bf16.mxu0 0
          %425 = vmatmul.mubr.bf16.gmra.mxu0 %v387
          %v426 = vpop.f32.mrf.mxu0
          %v427 = vadd.f32 0.0, %v426
          %v428 = vpop.f32.mrf.mxu0
          %v429 = vpop.f32.mrf.mxu0
          %v430 = vadd.f32 0.0, %v429
          %v431 = vpop.f32.mrf.mxu0
          %432 = vdwg.mxu0
          %v434 = vsel %vm385, %v374, 0
          %v437 = vsel %vm385, %v378, 0
          %439 = vmatprep.subr.bf16.mxu0 0
          %440 = vmatpush1.bf16.xpose.msra.mxu0 0
          %441 = vmatprep.subr.bf16.mxu0 0
          %442 = vmatpush1.bf16.xpose.msra.mxu0 0
          %443 = vmatprep.subr.bf16.mxu0 0
          %444 = vmatpush1.bf16.xpose.msra.mxu0 0
          %445 = vmatprep.subr.bf16.mxu0 0
          %446 = vmatpush1.bf16.xpose.msra.mxu0 0
          %447 = vmatprep.subr.bf16.mxu0 0
          %448 = vmatpush1.bf16.xpose.msra.mxu0 0
          %449 = vmatprep.subr.bf16.mxu0 0
          %450 = vmatpush1.bf16.xpose.msra.mxu0 0
          %451 = vmatprep.subr.bf16.mxu0 0
          %452 = vmatpush1.bf16.xpose.msra.mxu0 0
          %453 = vmatprep.subr.bf16.mxu0 0
          %454 = vmatpush1.bf16.xpose.msra.mxu0 %v437
          %455 = vmatprep.subr.bf16.mxu0 0
          %456 = vmatpush2.bf16.xpose.msra.mxu0 0
          %457 = vmatprep.subr.bf16.mxu0 0
          %458 = vmatpush2.bf16.xpose.msra.mxu0 0
          %459 = vmatprep.subr.bf16.mxu0 0
          %460 = vmatpush2.bf16.xpose.msra.mxu0 0
          %461 = vmatprep.subr.bf16.mxu0 0
          %462 = vmatpush2.bf16.xpose.msra.mxu0 0
          %463 = vmatprep.subr.bf16.mxu0 0
          %464 = vmatpush2.bf16.xpose.msra.mxu0 0
          %465 = vmatprep.subr.bf16.mxu0 0
          %466 = vmatpush2.bf16.xpose.msra.mxu0 0
          %467 = vmatprep.subr.bf16.mxu0 0
          %468 = vmatpush2.bf16.xpose.msra.mxu0 0
          %469 = vmatprep.subr.bf16.mxu0 0
          %470 = vmatpush2.bf16.xpose.msra.mxu0 0
          %471 = vmatprep.mubr.bf16.mxu0 0
          %472 = vmatmul.mubr.bf16.gmra.mxu0 %v434
          %v473 = vpop.f32.mrf.mxu0
          %v474 = vadd.f32 0.0, %v473
          %v475 = vpop.f32.mrf.mxu0
          %v476 = vpop.f32.mrf.mxu0
          %v477 = vadd.f32 0.0, %v476
          %v478 = vpop.f32.mrf.mxu0
          %479 = vdwg.mxu0
          %v481 = vsel %vm385, %v375, 0
          %v484 = vsel %vm385, %v379, 0
          %486 = vmatprep.subr.bf16.mxu0 0
          %487 = vmatpush1.bf16.xpose.msra.mxu0 0
          %488 = vmatprep.subr.bf16.mxu0 0
          %489 = vmatpush1.bf16.xpose.msra.mxu0 0
          %490 = vmatprep.subr.bf16.mxu0 0
          %491 = vmatpush1.bf16.xpose.msra.mxu0 0
          %492 = vmatprep.subr.bf16.mxu0 0
          %493 = vmatpush1.bf16.xpose.msra.mxu0 0
          %494 = vmatprep.subr.bf16.mxu0 0
          %495 = vmatpush1.bf16.xpose.msra.mxu0 0
          %496 = vmatprep.subr.bf16.mxu0 0
          %497 = vmatpush1.bf16.xpose.msra.mxu0 0
          %498 = vmatprep.subr.bf16.mxu0 0
          %499 = vmatpush1.bf16.xpose.msra.mxu0 0
          %500 = vmatprep.subr.bf16.mxu0 0
          %501 = vmatpush1.bf16.xpose.msra.mxu0 %v484
          %502 = vmatprep.subr.bf16.mxu0 0
          %503 = vmatpush2.bf16.xpose.msra.mxu0 0
          %504 = vmatprep.subr.bf16.mxu0 0
          %505 = vmatpush2.bf16.xpose.msra.mxu0 0
          %506 = vmatprep.subr.bf16.mxu0 0
          %507 = vmatpush2.bf16.xpose.msra.mxu0 0
          %508 = vmatprep.subr.bf16.mxu0 0
          %509 = vmatpush2.bf16.xpose.msra.mxu0 0
          %510 = vmatprep.subr.bf16.mxu0 0
          %511 = vmatpush2.bf16.xpose.msra.mxu0 0
          %512 = vmatprep.subr.bf16.mxu0 0
          %513 = vmatpush2.bf16.xpose.msra.mxu0 0
          %514 = vmatprep.subr.bf16.mxu0 0
          %515 = vmatpush2.bf16.xpose.msra.mxu0 0
          %516 = vmatprep.subr.bf16.mxu0 0
          %517 = vmatpush2.bf16.xpose.msra.mxu0 0
          %518 = vmatprep.mubr.bf16.mxu0 0
          %519 = vmatmul.mubr.bf16.gmra.mxu0 %v481
          %v520 = vpop.f32.mrf.mxu0
          %v521 = vadd.f32 0.0, %v520
          %v522 = vpop.f32.mrf.mxu0
          %v523 = vpop.f32.mrf.mxu0
          %v524 = vadd.f32 0.0, %v523
          %v525 = vpop.f32.mrf.mxu0
          %526 = vdwg.mxu0
          %v528 = vsel %vm385, %v376, 0
          %v531 = vsel %vm385, %v380, 0
          %533 = vmatprep.subr.bf16.mxu0 0
          %534 = vmatpush1.bf16.xpose.msra.mxu0 0
          %535 = vmatprep.subr.bf16.mxu0 0
          %536 = vmatpush1.bf16.xpose.msra.mxu0 0
          %537 = vmatprep.subr.bf16.mxu0 0
          %538 = vmatpush1.bf16.xpose.msra.mxu0 0
          %539 = vmatprep.subr.bf16.mxu0 0
          %540 = vmatpush1.bf16.xpose.msra.mxu0 0
          %541 = vmatprep.subr.bf16.mxu0 0
          %542 = vmatpush1.bf16.xpose.msra.mxu0 0
          %543 = vmatprep.subr.bf16.mxu0 0
          %544 = vmatpush1.bf16.xpose.msra.mxu0 0
          %545 = vmatprep.subr.bf16.mxu0 0
          %546 = vmatpush1.bf16.xpose.msra.mxu0 0
          %547 = vmatprep.subr.bf16.mxu0 0
          %548 = vmatpush1.bf16.xpose.msra.mxu0 %v531
          %549 = vmatprep.subr.bf16.mxu0 0
          %550 = vmatpush2.bf16.xpose.msra.mxu0 0
          %551 = vmatprep.subr.bf16.mxu0 0
          %552 = vmatpush2.bf16.xpose.msra.mxu0 0
          %553 = vmatprep.subr.bf16.mxu0 0
          %554 = vmatpush2.bf16.xpose.msra.mxu0 0
          %555 = vmatprep.subr.bf16.mxu0 0
          %556 = vmatpush2.bf16.xpose.msra.mxu0 0
          %557 = vmatprep.subr.bf16.mxu0 0
          %558 = vmatpush2.bf16.xpose.msra.mxu0 0
          %559 = vmatprep.subr.bf16.mxu0 0
          %560 = vmatpush2.bf16.xpose.msra.mxu0 0
          %561 = vmatprep.subr.bf16.mxu0 0
          %562 = vmatpush2.bf16.xpose.msra.mxu0 0
          %563 = vmatprep.subr.bf16.mxu0 0
          %564 = vmatpush2.bf16.xpose.msra.mxu0 0
          %565 = vmatprep.mubr.bf16.mxu0 0
          %566 = vmatmul.mubr.bf16.gmra.mxu0 %v528
          %v567 = vpop.f32.mrf.mxu0
          %v568 = vadd.f32 0.0, %v567
          %v569 = vpop.f32.mrf.mxu0
          %v570 = vpop.f32.mrf.mxu0
          %v571 = vadd.f32 0.0, %v570
          %v572 = vpop.f32.mrf.mxu0
          %573 = vdwg.mxu0
          %v574 = vlaneseq
          %v575 = vshrl.u32 %v574, 7
          %v576 = vadd.s32 %v575, 8
          %v577 = vstv %s304
          %v578 = vadd.s32 %v575, %v577
          %v579 = vadd.s32 %v576, %v577
          %v580 = vlaneseq
          %v581 = vand.u32 %v580, 127
          %v582 = vstv %s305
          %v583 = vadd.s32 %v581, %v582
          %vm584 = vcmp.le.s32.totalorder %v583, %v578
          %vm585 = vcmp.le.s32.totalorder %v583, %v579
          %v586 = vsel %vm584, 1, 0
          %v587 = vsel %vm585, 1, 0
          %vm588 = vcmp.eq.s32.totalorder %v586, 1
          %vm589 = vcmp.eq.s32.totalorder %v587, 1
          %v590 = vsel %vm588, %v427, -2.3819763e+38
          %v591 = vsel %vm589, %v430, -2.3819763e+38
          %v592 = vsel %vm588, %v474, -2.3819763e+38
          %v593 = vsel %vm589, %v477, -2.3819763e+38
          %v594 = vsel %vm588, %v521, -2.3819763e+38
          %v595 = vsel %vm589, %v524, -2.3819763e+38
          %v596 = vsel %vm588, %v568, -2.3819763e+38
          %v597 = vsel %vm589, %v571, -2.3819763e+38
          %v598 = vld [vmem:[#allocation2] sm:$0xff]
          %v599 = vld [vmem:[#allocation2 + $0x8] sm:$0xff]
          %v600 = vld [vmem:[#allocation2 + $0x10] sm:$0xff]
          %v601 = vld [vmem:[#allocation2 + $0x18] sm:$0xff]
          %v602 = vld [vmem:[#allocation2 + $0x20] sm:$0xff]
          %v603 = vld [vmem:[#allocation2 + $0x28] sm:$0xff]
          %v604 = vld [vmem:[#allocation2 + $0x30] sm:$0xff]
          %v605 = vld [vmem:[#allocation2 + $0x38] sm:$0xff]
          %vm606 = vcmask 130048
          %v607 = vsel %vm606, %v590, -inf
          %608 = vmax.xlane.f32.xlu0 %v607
          %v609 = vpop.xlane.xlu0 %608
          %v610 = vsel %vm606, %v591, -inf
          %611 = vmax.xlane.f32.xlu0 %v610
          %v612 = vpop.xlane.xlu0 %611
          %v613 = vsel %vm606, %v592, -inf
          %614 = vmax.xlane.f32.xlu0 %v613
          %v615 = vpop.xlane.xlu0 %614
          %v616 = vsel %vm606, %v593, -inf
          %617 = vmax.xlane.f32.xlu0 %v616
          %v618 = vpop.xlane.xlu0 %617
          %v619 = vsel %vm606, %v594, -inf
          %620 = vmax.xlane.f32.xlu0 %v619
          %v621 = vpop.xlane.xlu0 %620
          %v622 = vsel %vm606, %v595, -inf
          %623 = vmax.xlane.f32.xlu0 %v622
          %v624 = vpop.xlane.xlu0 %623
          %v625 = vsel %vm606, %v596, -inf
          %626 = vmax.xlane.f32.xlu0 %v625
          %v627 = vpop.xlane.xlu0 %626
          %v628 = vsel %vm606, %v597, -inf
          %629 = vmax.xlane.f32.xlu0 %v628
          %v630 = vpop.xlane.xlu0 %629
          %v631 = vmax.f32 %v598, %v609
          %v632 = vmax.f32 %v599, %v612
          %v633 = vmax.f32 %v600, %v615
          %v634 = vmax.f32 %v601, %v618
          %v635 = vmax.f32 %v602, %v621
          %v636 = vmax.f32 %v603, %v624
          %v637 = vmax.f32 %v604, %v627
          %v638 = vmax.f32 %v605, %v630
          %v639 = vsub.f32 %v598, %v631
          %v640 = vsub.f32 %v599, %v632
          %v641 = vsub.f32 %v600, %v633
          %v642 = vsub.f32 %v601, %v634
          %v643 = vsub.f32 %v602, %v635
          %v644 = vsub.f32 %v603, %v636
          %v645 = vsub.f32 %v604, %v637
          %v646 = vsub.f32 %v605, %v638
          %v647 = vmul.f32 %v639, 1.442695
          %v648 = vpow.pop %v647
          %v649 = vmul.f32 %v640, 1.442695
          %v650 = vpow.pop %v649
          %v651 = vmul.f32 %v641, 1.442695
          %v652 = vpow.pop %v651
          %v653 = vmul.f32 %v642, 1.442695
          %v654 = vpow.pop %v653
          %v655 = vmul.f32 %v643, 1.442695
          %v656 = vpow.pop %v655
          %v657 = vmul.f32 %v644, 1.442695
          %v658 = vpow.pop %v657
          %v659 = vmul.f32 %v645, 1.442695
          %v660 = vpow.pop %v659
          %v661 = vmul.f32 %v646, 1.442695
          %v662 = vpow.pop %v661
          %664 = vset.pattern.permute.xlu0 0
          %665 = vperm.xlu0 %664, %v631
          %v666 = vpop.permute.xlu0 %665
          %669 = vset.pattern.permute.xlu0 0
          %670 = vperm.xlu0 %669, %v632
          %v671 = vpop.permute.xlu0 %670
          %674 = vset.pattern.permute.xlu0 0
          %675 = vperm.xlu0 %674, %v633
          %v676 = vpop.permute.xlu0 %675
          %679 = vset.pattern.permute.xlu0 0
          %680 = vperm.xlu0 %679, %v634
          %v681 = vpop.permute.xlu0 %680
          %684 = vset.pattern.permute.xlu0 0
          %685 = vperm.xlu0 %684, %v635
          %v686 = vpop.permute.xlu0 %685
          %689 = vset.pattern.permute.xlu0 0
          %690 = vperm.xlu0 %689, %v636
          %v691 = vpop.permute.xlu0 %690
          %694 = vset.pattern.permute.xlu0 0
          %695 = vperm.xlu0 %694, %v637
          %v696 = vpop.permute.xlu0 %695
          %699 = vset.pattern.permute.xlu0 0
          %700 = vperm.xlu0 %699, %v638
          %v701 = vpop.permute.xlu0 %700
          %v703 = vsub.f32 %v590, %v666
          %v704 = vsub.f32 %v591, %v671
          %v705 = vsub.f32 %v592, %v676
          %v706 = vsub.f32 %v593, %v681
          %v707 = vsub.f32 %v594, %v686
          %v708 = vsub.f32 %v595, %v691
          %v709 = vsub.f32 %v596, %v696
          %v710 = vsub.f32 %v597, %v701
          %v711 = vmul.f32 %v703, 1.442695
          %v712 = vpow.pop %v711
          %v713 = vmul.f32 %v704, 1.442695
          %v714 = vpow.pop %v713
          %v715 = vmul.f32 %v705, 1.442695
          %v716 = vpow.pop %v715
          %v717 = vmul.f32 %v706, 1.442695
          %v718 = vpow.pop %v717
          %v719 = vmul.f32 %v707, 1.442695
          %v720 = vpow.pop %v719
          %v721 = vmul.f32 %v708, 1.442695
          %v722 = vpow.pop %v721
          %v723 = vmul.f32 %v709, 1.442695
          %v724 = vpow.pop %v723
          %v725 = vmul.f32 %v710, 1.442695
          %v726 = vpow.pop %v725
          %v727 = vld [vmem:[#allocation3] sm:$0xff]
          %v728 = vld [vmem:[#allocation3 + $0x8] sm:$0xff]
          %v729 = vld [vmem:[#allocation3 + $0x10] sm:$0xff]
          %v730 = vld [vmem:[#allocation3 + $0x18] sm:$0xff]
          %v731 = vld [vmem:[#allocation3 + $0x20] sm:$0xff]
          %v732 = vld [vmem:[#allocation3 + $0x28] sm:$0xff]
          %v733 = vld [vmem:[#allocation3 + $0x30] sm:$0xff]
          %v734 = vld [vmem:[#allocation3 + $0x38] sm:$0xff]
          %v735 = vmul.f32 %v648, %v727
          %v736 = vmul.f32 %v650, %v728
          %v737 = vmul.f32 %v652, %v729
          %v738 = vmul.f32 %v654, %v730
          %v739 = vmul.f32 %v656, %v731
          %v740 = vmul.f32 %v658, %v732
          %v741 = vmul.f32 %v660, %v733
          %v742 = vmul.f32 %v662, %v734
          %v743 = vsel %vm606, %v712, 0.0
          %744 = vadd.xlane.f32.xlu0 %v743
          %v745 = vpop.xlane.xlu0 %744
          %v746 = vsel %vm606, %v714, 0.0
          %747 = vadd.xlane.f32.xlu0 %v746
          %v748 = vpop.xlane.xlu0 %747
          %v749 = vsel %vm606, %v716, 0.0
          %750 = vadd.xlane.f32.xlu0 %v749
          %v751 = vpop.xlane.xlu0 %750
          %v752 = vsel %vm606, %v718, 0.0
          %753 = vadd.xlane.f32.xlu0 %v752
          %v754 = vpop.xlane.xlu0 %753
          %v755 = vsel %vm606, %v720, 0.0
          %756 = vadd.xlane.f32.xlu0 %v755
          %v757 = vpop.xlane.xlu0 %756
          %v758 = vsel %vm606, %v722, 0.0
          %759 = vadd.xlane.f32.xlu0 %v758
          %v760 = vpop.xlane.xlu0 %759
          %v761 = vsel %vm606, %v724, 0.0
          %762 = vadd.xlane.f32.xlu0 %v761
          %v763 = vpop.xlane.xlu0 %762
          %v764 = vsel %vm606, %v726, 0.0
          %765 = vadd.xlane.f32.xlu0 %v764
          %v766 = vpop.xlane.xlu0 %765
          %v767 = vadd.f32 %v735, %v745
          %v768 = vadd.f32 %v736, %v748
          %v769 = vadd.f32 %v737, %v751
          %v770 = vadd.f32 %v738, %v754
          %v771 = vadd.f32 %v739, %v757
          %v772 = vadd.f32 %v740, %v760
          %v773 = vadd.f32 %v741, %v763
          %v774 = vadd.f32 %v742, %v766
          %vm775 = vcmask 7168
          %776 = vst.msk [vmem:[#allocation3] sm:$0xff] %vm775, %v767
          %777 = vst.msk [vmem:[#allocation3 + $0x8] sm:$0xff] %vm775, %v768
          %778 = vst.msk [vmem:[#allocation3 + $0x10] sm:$0xff] %vm775, %v769
          %779 = vst.msk [vmem:[#allocation3 + $0x18] sm:$0xff] %vm775, %v770
          %780 = vst.msk [vmem:[#allocation3 + $0x20] sm:$0xff] %vm775, %v771
          %781 = vst.msk [vmem:[#allocation3 + $0x28] sm:$0xff] %vm775, %v772
          %782 = vst.msk [vmem:[#allocation3 + $0x30] sm:$0xff] %vm775, %v773
          %783 = vst.msk [vmem:[#allocation3 + $0x38] sm:$0xff] %vm775, %v774
          %v784 = vpack.c.bf16 %v714, %v712
          %v785 = vpack.c.bf16 %v718, %v716
          %v786 = vpack.c.bf16 %v722, %v720
          %v787 = vpack.c.bf16 %v726, %v724
          %v788 = vld [vmem:[#allocation4] sm:$0xff]
          %v789 = vld [vmem:[#allocation4 + $0x8] sm:$0xff]
          %v790 = vld [vmem:[#allocation4 + $0x10] sm:$0xff]
          %v791 = vld [vmem:[#allocation4 + $0x18] sm:$0xff]
          %v792 = vld [vmem:[#allocation4 + $0x20] sm:$0xff]
          %v793 = vld [vmem:[#allocation4 + $0x28] sm:$0xff]
          %v794 = vld [vmem:[#allocation4 + $0x30] sm:$0xff]
          %v795 = vld [vmem:[#allocation4 + $0x38] sm:$0xff]
          %797 = vset.pattern.permute.xlu0 0
          %798 = vperm.xlu0 %797, %v648
          %v799 = vpop.permute.xlu0 %798
          %802 = vset.pattern.permute.xlu0 0
          %803 = vperm.xlu0 %802, %v650
          %v804 = vpop.permute.xlu0 %803
          %807 = vset.pattern.permute.xlu0 0
          %808 = vperm.xlu0 %807, %v652
          %v809 = vpop.permute.xlu0 %808
          %812 = vset.pattern.permute.xlu0 0
          %813 = vperm.xlu0 %812, %v654
          %v814 = vpop.permute.xlu0 %813
          %817 = vset.pattern.permute.xlu0 0
          %818 = vperm.xlu0 %817, %v656
          %v819 = vpop.permute.xlu0 %818
          %822 = vset.pattern.permute.xlu0 0
          %823 = vperm.xlu0 %822, %v658
          %v824 = vpop.permute.xlu0 %823
          %827 = vset.pattern.permute.xlu0 0
          %828 = vperm.xlu0 %827, %v660
          %v829 = vpop.permute.xlu0 %828
          %832 = vset.pattern.permute.xlu0 0
          %833 = vperm.xlu0 %832, %v662
          %v834 = vpop.permute.xlu0 %833
          %v836 = vmul.f32 %v799, %v788
          %v837 = vmul.f32 %v804, %v789
          %v838 = vmul.f32 %v809, %v790
          %v839 = vmul.f32 %v814, %v791
          %v840 = vmul.f32 %v819, %v792
          %v841 = vmul.f32 %v824, %v793
          %v842 = vmul.f32 %v829, %v794
          %v843 = vmul.f32 %v834, %v795
          %v845 = vsel %vm606, %v784, 0
          %847 = vmatprep.subr.bf16.mxu0 0
          %848 = vmatpush1.bf16.msra.mxu0 0
          %849 = vmatprep.subr.bf16.mxu0 0
          %850 = vmatpush1.bf16.msra.mxu0 0
          %851 = vmatprep.subr.bf16.mxu0 0
          %852 = vmatpush1.bf16.msra.mxu0 0
          %853 = vmatprep.subr.bf16.mxu0 0
          %854 = vmatpush1.bf16.msra.mxu0 0
          %855 = vmatprep.subr.bf16.mxu0 0
          %856 = vmatpush1.bf16.msra.mxu0 0
          %857 = vmatprep.subr.bf16.mxu0 0
          %858 = vmatpush1.bf16.msra.mxu0 0
          %859 = vmatprep.subr.bf16.mxu0 0
          %860 = vmatpush1.bf16.msra.mxu0 0
          %861 = vmatprep.subr.bf16.mxu0 0
          %862 = vmatpush1.bf16.msra.mxu0 %v381
          %863 = vmatprep.subr.bf16.mxu0 0
          %864 = vmatpush2.bf16.msra.mxu0 0
          %865 = vmatprep.subr.bf16.mxu0 0
          %866 = vmatpush2.bf16.msra.mxu0 0
          %867 = vmatprep.subr.bf16.mxu0 0
          %868 = vmatpush2.bf16.msra.mxu0 0
          %869 = vmatprep.subr.bf16.mxu0 0
          %870 = vmatpush2.bf16.msra.mxu0 0
          %871 = vmatprep.subr.bf16.mxu0 0
          %872 = vmatpush2.bf16.msra.mxu0 0
          %873 = vmatprep.subr.bf16.mxu0 0
          %874 = vmatpush2.bf16.msra.mxu0 0
          %875 = vmatprep.subr.bf16.mxu0 0
          %876 = vmatpush2.bf16.msra.mxu0 0
          %877 = vmatprep.subr.bf16.mxu0 0
          %878 = vmatpush2.bf16.msra.mxu0 0
          %879 = vmatprep.mubr.bf16.mxu0 0
          %880 = vmatmul.mubr.bf16.gmra.mxu0 %v845
          %v881 = vpop.f32.mrf.mxu0
          %v882 = vadd.f32 0.0, %v881
          %v883 = vpop.f32.mrf.mxu0
          %v884 = vpop.f32.mrf.mxu0
          %v885 = vadd.f32 0.0, %v884
          %v886 = vpop.f32.mrf.mxu0
          %887 = vdwg.mxu0
          %v889 = vsel %vm606, %v785, 0
          %891 = vmatprep.subr.bf16.mxu0 0
          %892 = vmatpush1.bf16.msra.mxu0 0
          %893 = vmatprep.subr.bf16.mxu0 0
          %894 = vmatpush1.bf16.msra.mxu0 0
          %895 = vmatprep.subr.bf16.mxu0 0
          %896 = vmatpush1.bf16.msra.mxu0 0
          %897 = vmatprep.subr.bf16.mxu0 0
          %898 = vmatpush1.bf16.msra.mxu0 0
          %899 = vmatprep.subr.bf16.mxu0 0
          %900 = vmatpush1.bf16.msra.mxu0 0
          %901 = vmatprep.subr.bf16.mxu0 0
          %902 = vmatpush1.bf16.msra.mxu0 0
          %903 = vmatprep.subr.bf16.mxu0 0
          %904 = vmatpush1.bf16.msra.mxu0 0
          %905 = vmatprep.subr.bf16.mxu0 0
          %906 = vmatpush1.bf16.msra.mxu0 %v382
          %907 = vmatprep.subr.bf16.mxu0 0
          %908 = vmatpush2.bf16.msra.mxu0 0
          %909 = vmatprep.subr.bf16.mxu0 0
          %910 = vmatpush2.bf16.msra.mxu0 0
          %911 = vmatprep.subr.bf16.mxu0 0
          %912 = vmatpush2.bf16.msra.mxu0 0
          %913 = vmatprep.subr.bf16.mxu0 0
          %914 = vmatpush2.bf16.msra.mxu0 0
          %915 = vmatprep.subr.bf16.mxu0 0
          %916 = vmatpush2.bf16.msra.mxu0 0
          %917 = vmatprep.subr.bf16.mxu0 0
          %918 = vmatpush2.bf16.msra.mxu0 0
          %919 = vmatprep.subr.bf16.mxu0 0
          %920 = vmatpush2.bf16.msra.mxu0 0
          %921 = vmatprep.subr.bf16.mxu0 0
          %922 = vmatpush2.bf16.msra.mxu0 0
          %923 = vmatprep.mubr.bf16.mxu0 0
          %924 = vmatmul.mubr.bf16.gmra.mxu0 %v889
          %v925 = vpop.f32.mrf.mxu0
          %v926 = vadd.f32 0.0, %v925
          %v927 = vpop.f32.mrf.mxu0
          %v928 = vpop.f32.mrf.mxu0
          %v929 = vadd.f32 0.0, %v928
          %v930 = vpop.f32.mrf.mxu0
          %931 = vdwg.mxu0
          %v933 = vsel %vm606, %v786, 0
          %935 = vmatprep.subr.bf16.mxu0 0
          %936 = vmatpush1.bf16.msra.mxu0 0
          %937 = vmatprep.subr.bf16.mxu0 0
          %938 = vmatpush1.bf16.msra.mxu0 0
          %939 = vmatprep.subr.bf16.mxu0 0
          %940 = vmatpush1.bf16.msra.mxu0 0
          %941 = vmatprep.subr.bf16.mxu0 0
          %942 = vmatpush1.bf16.msra.mxu0 0
          %943 = vmatprep.subr.bf16.mxu0 0
          %944 = vmatpush1.bf16.msra.mxu0 0
          %945 = vmatprep.subr.bf16.mxu0 0
          %946 = vmatpush1.bf16.msra.mxu0 0
          %947 = vmatprep.subr.bf16.mxu0 0
          %948 = vmatpush1.bf16.msra.mxu0 0
          %949 = vmatprep.subr.bf16.mxu0 0
          %950 = vmatpush1.bf16.msra.mxu0 %v383
          %951 = vmatprep.subr.bf16.mxu0 0
          %952 = vmatpush2.bf16.msra.mxu0 0
          %953 = vmatprep.subr.bf16.mxu0 0
          %954 = vmatpush2.bf16.msra.mxu0 0
          %955 = vmatprep.subr.bf16.mxu0 0
          %956 = vmatpush2.bf16.msra.mxu0 0
          %957 = vmatprep.subr.bf16.mxu0 0
          %958 = vmatpush2.bf16.msra.mxu0 0
          %959 = vmatprep.subr.bf16.mxu0 0
          %960 = vmatpush2.bf16.msra.mxu0 0
          %961 = vmatprep.subr.bf16.mxu0 0
          %962 = vmatpush2.bf16.msra.mxu0 0
          %963 = vmatprep.subr.bf16.mxu0 0
          %964 = vmatpush2.bf16.msra.mxu0 0
          %965 = vmatprep.subr.bf16.mxu0 0
          %966 = vmatpush2.bf16.msra.mxu0 0
          %967 = vmatprep.mubr.bf16.mxu0 0
          %968 = vmatmul.mubr.bf16.gmra.mxu0 %v933
          %v969 = vpop.f32.mrf.mxu0
          %v970 = vadd.f32 0.0, %v969
          %v971 = vpop.f32.mrf.mxu0
          %v972 = vpop.f32.mrf.mxu0
          %v973 = vadd.f32 0.0, %v972
          %v974 = vpop.f32.mrf.mxu0
          %975 = vdwg.mxu0
          %v977 = vsel %vm606, %v787, 0
          %979 = vmatprep.subr.bf16.mxu0 0
          %980 = vmatpush1.bf16.msra.mxu0 0
          %981 = vmatprep.subr.bf16.mxu0 0
          %982 = vmatpush1.bf16.msra.mxu0 0
          %983 = vmatprep.subr.bf16.mxu0 0
          %984 = vmatpush1.bf16.msra.mxu0 0
          %985 = vmatprep.subr.bf16.mxu0 0
          %986 = vmatpush1.bf16.msra.mxu0 0
          %987 = vmatprep.subr.bf16.mxu0 0
          %988 = vmatpush1.bf16.msra.mxu0 0
          %989 = vmatprep.subr.bf16.mxu0 0
          %990 = vmatpush1.bf16.msra.mxu0 0
          %991 = vmatprep.subr.bf16.mxu0 0
          %992 = vmatpush1.bf16.msra.mxu0 0
          %993 = vmatprep.subr.bf16.mxu0 0
          %994 = vmatpush1.bf16.msra.mxu0 %v384
          %995 = vmatprep.subr.bf16.mxu0 0
          %996 = vmatpush2.bf16.msra.mxu0 0
          %997 = vmatprep.subr.bf16.mxu0 0
          %998 = vmatpush2.bf16.msra.mxu0 0
          %999 = vmatprep.subr.bf16.mxu0 0
          %1000 = vmatpush2.bf16.msra.mxu0 0
          %1001 = vmatprep.subr.bf16.mxu0 0
          %1002 = vmatpush2.bf16.msra.mxu0 0
          %1003 = vmatprep.subr.bf16.mxu0 0
          %1004 = vmatpush2.bf16.msra.mxu0 0
          %1005 = vmatprep.subr.bf16.mxu0 0
          %1006 = vmatpush2.bf16.msra.mxu0 0
          %1007 = vmatprep.subr.bf16.mxu0 0
          %1008 = vmatpush2.bf16.msra.mxu0 0
          %1009 = vmatprep.subr.bf16.mxu0 0
          %1010 = vmatpush2.bf16.msra.mxu0 0
          %1011 = vmatprep.mubr.bf16.mxu0 0
          %1012 = vmatmul.mubr.bf16.gmra.mxu0 %v977
          %v1013 = vpop.f32.mrf.mxu0
          %v1014 = vadd.f32 0.0, %v1013
          %v1015 = vpop.f32.mrf.mxu0
          %v1016 = vpop.f32.mrf.mxu0
          %v1017 = vadd.f32 0.0, %v1016
          %v1018 = vpop.f32.mrf.mxu0
          %1019 = vdwg.mxu0
          %v1020 = vadd.f32 %v836, %v882
          %v1021 = vadd.f32 %v837, %v885
          %v1022 = vadd.f32 %v838, %v926
          %v1023 = vadd.f32 %v839, %v929
          %v1024 = vadd.f32 %v840, %v970
          %v1025 = vadd.f32 %v841, %v973
          %v1026 = vadd.f32 %v842, %v1014
          %v1027 = vadd.f32 %v843, %v1017
          %1028 = vst.msk [vmem:[#allocation4] sm:$0xff] %vm385, %v1020
          %1029 = vst.msk [vmem:[#allocation4 + $0x8] sm:$0xff] %vm385, %v1021
          %1030 = vst.msk [vmem:[#allocation4 + $0x10] sm:$0xff] %vm385, %v1022
          %1031 = vst.msk [vmem:[#allocation4 + $0x18] sm:$0xff] %vm385, %v1023
          %1032 = vst.msk [vmem:[#allocation4 + $0x20] sm:$0xff] %vm385, %v1024
          %1033 = vst.msk [vmem:[#allocation4 + $0x28] sm:$0xff] %vm385, %v1025
          %1034 = vst.msk [vmem:[#allocation4 + $0x30] sm:$0xff] %vm385, %v1026
          %1035 = vst.msk [vmem:[#allocation4 + $0x38] sm:$0xff] %vm385, %v1027
          %1036 = vst.msk [vmem:[#allocation2] sm:$0xff] %vm775, %v631
          %1037 = vst.msk [vmem:[#allocation2 + $0x8] sm:$0xff] %vm775, %v632
          %1038 = vst.msk [vmem:[#allocation2 + $0x10] sm:$0xff] %vm775, %v633
          %1039 = vst.msk [vmem:[#allocation2 + $0x18] sm:$0xff] %vm775, %v634
          %1040 = vst.msk [vmem:[#allocation2 + $0x20] sm:$0xff] %vm775, %v635
          %1041 = vst.msk [vmem:[#allocation2 + $0x28] sm:$0xff] %vm775, %v636
          %1042 = vst.msk [vmem:[#allocation2 + $0x30] sm:$0xff] %vm775, %v637
          %1043 = vst.msk [vmem:[#allocation2 + $0x38] sm:$0xff] %vm775, %v638
        $region52: #{tpu_custom_call.1} parent=31 // pred_fallthru
          _
        // Predicated region
        $region53: #{tpu_custom_call.1} parent=31 // pred_check
          %p1044 = pneg %p306
        $region54: #{tpu_custom_call.1} parent=31 // pred_check_branch
          %1046 = sbr.rel (%p1044) target = $region56
        $region55: #{tpu_custom_call.1} parent=31 // pred_region
          %v1047 = vld [vmem:[#allocation3] sm:$0xff]
          %v1048 = vld [vmem:[#allocation3 + $0x8] sm:$0xff]
          %v1049 = vld [vmem:[#allocation3 + $0x10] sm:$0xff]
          %v1050 = vld [vmem:[#allocation3 + $0x18] sm:$0xff]
          %v1051 = vld [vmem:[#allocation3 + $0x20] sm:$0xff]
          %v1052 = vld [vmem:[#allocation3 + $0x28] sm:$0xff]
          %v1053 = vld [vmem:[#allocation3 + $0x30] sm:$0xff]
          %v1054 = vld [vmem:[#allocation3 + $0x38] sm:$0xff]
          %v1055 = vrcp.pop %v1047
          %v1056 = vrcp.pop %v1048
          %v1057 = vrcp.pop %v1049
          %v1058 = vrcp.pop %v1050
          %v1059 = vrcp.pop %v1051
          %v1060 = vrcp.pop %v1052
          %v1061 = vrcp.pop %v1053
          %v1062 = vrcp.pop %v1054
          %v1063 = vld [vmem:[#allocation4] sm:$0xff]
          %v1064 = vld [vmem:[#allocation4 + $0x8] sm:$0xff]
          %v1065 = vld [vmem:[#allocation4 + $0x10] sm:$0xff]
          %v1066 = vld [vmem:[#allocation4 + $0x18] sm:$0xff]
          %v1067 = vld [vmem:[#allocation4 + $0x20] sm:$0xff]
          %v1068 = vld [vmem:[#allocation4 + $0x28] sm:$0xff]
          %v1069 = vld [vmem:[#allocation4 + $0x30] sm:$0xff]
          %v1070 = vld [vmem:[#allocation4 + $0x38] sm:$0xff]
          %1072 = vset.pattern.permute.xlu0 0
          %1073 = vperm.xlu0 %1072, %v1055
          %v1074 = vpop.permute.xlu0 %1073
          %1077 = vset.pattern.permute.xlu0 0
          %1078 = vperm.xlu0 %1077, %v1056
          %v1079 = vpop.permute.xlu0 %1078
          %1082 = vset.pattern.permute.xlu0 0
          %1083 = vperm.xlu0 %1082, %v1057
          %v1084 = vpop.permute.xlu0 %1083
          %1087 = vset.pattern.permute.xlu0 0
          %1088 = vperm.xlu0 %1087, %v1058
          %v1089 = vpop.permute.xlu0 %1088
          %1092 = vset.pattern.permute.xlu0 0
          %1093 = vperm.xlu0 %1092, %v1059
          %v1094 = vpop.permute.xlu0 %1093
          %1097 = vset.pattern.permute.xlu0 0
          %1098 = vperm.xlu0 %1097, %v1060
          %v1099 = vpop.permute.xlu0 %1098
          %1102 = vset.pattern.permute.xlu0 0
          %1103 = vperm.xlu0 %1102, %v1061
          %v1104 = vpop.permute.xlu0 %1103
          %1107 = vset.pattern.permute.xlu0 0
          %1108 = vperm.xlu0 %1107, %v1062
          %v1109 = vpop.permute.xlu0 %1108
          %v1111 = vmul.f32 %v1063, %v1074
          %v1112 = vmul.f32 %v1064, %v1079
          %v1113 = vmul.f32 %v1065, %v1084
          %v1114 = vmul.f32 %v1066, %v1089
          %v1115 = vmul.f32 %v1067, %v1094
          %v1116 = vmul.f32 %v1068, %v1099
          %v1117 = vmul.f32 %v1069, %v1104
          %v1118 = vmul.f32 %v1070, %v1109
          %vm1119 = vcmask 261120
          %1120 = vst.msk [vmem:[%s298] sm:$0xff] %vm1119, %v1111
          %1121 = vst.msk [vmem:[%s298 + $0x8] sm:$0xff] %vm1119, %v1112
          %1124 = vrot.lane.b32.xlu0 %v1113, 32
          %v1125 = vpop.permute.xlu0 %1124
          %1126 = vrot.lane.b32.xlu0 %v1114, 32
          %v1127 = vpop.permute.xlu0 %1126
          %vm1130 = vcmask 523520
          %1131 = vst.msk [vmem:[%s298] sm:$0xff] %vm1130, %v1125
          %1132 = vst.msk [vmem:[%s298 + $0x8] sm:$0xff] %vm1130, %v1127
          %1135 = vrot.lane.b32.xlu0 %v1115, 64
          %v1136 = vpop.permute.xlu0 %1135
          %1137 = vrot.lane.b32.xlu0 %v1116, 64
          %v1138 = vpop.permute.xlu0 %1137
          %vm1141 = vcmask 785920
          %1142 = vst.msk [vmem:[%s298] sm:$0xff] %vm1141, %v1136
          %1143 = vst.msk [vmem:[%s298 + $0x8] sm:$0xff] %vm1141, %v1138
          %1146 = vrot.lane.b32.xlu0 %v1117, 96
          %v1147 = vpop.permute.xlu0 %1146
          %1148 = vrot.lane.b32.xlu0 %v1118, 96
          %v1149 = vpop.permute.xlu0 %1148
          %vm1152 = vcmask 1048320
          %1153 = vst.msk [vmem:[%s298] sm:$0xff] %vm1152, %v1147
          %1154 = vst.msk [vmem:[%s298 + $0x8] sm:$0xff] %vm1152, %v1149
        $region56: #{tpu_custom_call.1} parent=31 // pred_fallthru
          _
        %s1155 = sand.u32 %s136, 1
        %s1156 = scalar_lea.sflag [#allocation7], %s1155
        %s1157 = sand.u32 %s136, 1
        %s1158 = smul.addr %s1157, 16
        %s1159 = scalar_lea.vmem [#allocation11], %s1158
        // Predicated region
        $region57: #{tpu_custom_call.1} parent=31 // pred_check
          %p1160 = pneg %p146
        $region58: #{tpu_custom_call.1} parent=31 // pred_check_branch
          %1162 = sbr.rel (%p1160) target = $region60
        $region59: #{tpu_custom_call.1} parent=31 // pred_region
          %s1163 = smul.u32 2, %s29
          %s1165 = ssub.s32 256, 256
          %1166 = vsyncadd %s1156, %s1165
          %s1167 = smul.addr %s28, 2
          %s1168 = sadd.s32 %s1163, %s1167
          %s1169 = smul.addr %s1168, 128
          %s1170 = scalar_lea.hbm %s3, %s1169
          %s1171 = sshll.u32 %s1159, 4
          %s1172 = int_to_ptr.vmem [resolvable:$true] %s1171
          %1177 = dma.vmem_to_hbm [thread:$0]  %s1172, 256, %s1170, %s1156, 128, 128, 8
        $region60: #{tpu_custom_call.1} parent=31 // pred_fallthru
          _
      $region32: #{tpu_custom_call.1} parent=5 // pred_fallthru
        _
      %p1178 = scmp.le.s32.totalorder 2, %s18
      // Predicated region
      $region61: #{tpu_custom_call.1} parent=5 // pred_check
        %p1179 = pneg %p1178
      $region62: #{tpu_custom_call.1} parent=5 // pred_check_branch
        %1181 = sbr.rel (%p1179) target = $region64
      $region63: #{tpu_custom_call.1} parent=5 // pred_region
        %s1182 = ssub.s32 %s18, 2
        // Predicated region
        $region65: #{tpu_custom_call.1} parent=63 // pred_check
          %p1183 = pneg %p152
        $region66: #{tpu_custom_call.1} parent=63 // pred_check_branch
          %1185 = sbr.rel (%p1183) target = $region68
        $region67: #{tpu_custom_call.1} parent=63 // pred_region
          %s1186 = sand.u32 %s137, 1
          %s1187 = scalar_lea.sflag [#allocation7], %s1186
          %s1188 = sand.u32 %s137, 1
          %s1189 = smul.addr %s1188, 16
          %s1190 = scalar_lea.vmem [#allocation11], %s1189
          %1191 = dma.done %s1187, 256
        $region68: #{tpu_custom_call.1} parent=63 // pred_fallthru
          _
      $region64: #{tpu_custom_call.1} parent=5 // pred_fallthru
        _
    $region6: #{tpu_custom_call.1} parent=1 // loop_footer
      %s22 = sadd.s32 1, %s18
    $region7: #{tpu_custom_call.1} parent=1 // loop_footer_branch
      %17 = sbr.rel target = $region3
    $region8: #{tpu_custom_call.1} parent=1 // loop_exit
      _
    %1192 = vsyncpa [#allocation6], 1
    %s1193 = scalar_lea.sflag [#allocation6], 1
    %1194 = vsyncpa %s1193, 1
    %1195 = vsyncpa [#allocation9], 1
    %s1196 = scalar_lea.sflag [#allocation9], 1
    %1197 = vsyncpa %s1196, 1
    %1198 = vsyncpa [#allocation7], 1
    %s1199 = scalar_lea.sflag [#allocation7], 1
    %1200 = vsyncpa %s1199, 1

</llo_original>
